<compile_context>
chip_gen: v6e
topology: v6e:2x2x1
jax: 0.10.0
libtpu: 0.0.40
codegen_flags: <defaults>
</compile_context>

<pallas_src>
import jax
import jax.numpy as jnp
from jax import lax
from jax.experimental import pallas as pl
from jax.experimental.pallas import tpu as pltpu


def _vq_kernel(x_ref, embed_ref, embed_t_ref, esq_ref, q_ref, idx_ref, sse_ref):
    x = x_ref[...].astype(jnp.float32)            # (tm, dim)
    e = embed_ref[...].astype(jnp.float32)        # (dim, n_embed)   resident
    e_t = embed_t_ref[...].astype(jnp.float32)    # (n_embed, dim)   resident
    col_sq = esq_ref[...]                         # (1, n_embed)     resident, precomputed
    n_embed = e.shape[1]

    # Distance score: ||e||^2 - 2 x@e  (||x||^2 dropped -- argmin invariant).
    xe = jnp.dot(x, e, preferred_element_type=jnp.float32)     # MXU, (tm, n_embed)
    score = col_sq - 2.0 * xe

    # argmin along codebook axis (first index on ties), kept 2-D for TPU layout.
    min_s = jnp.min(score, axis=1, keepdims=True)                      # (tm, 1)
    lane = lax.broadcasted_iota(jnp.int32, score.shape, 1)             # (tm, n_embed)
    idx2d = jnp.min(jnp.where(score == min_s, lane, jnp.int32(n_embed)),
                    axis=1, keepdims=True)                             # (tm, 1)

    # Codebook lookup as onehot @ embed^T -- MXU-native shapes, no implicit
    # transpose of the codebook inside the loop.
    onehot = (lane == idx2d).astype(jnp.float32)                       # (tm, n_embed)
    q = jnp.dot(onehot, e_t, preferred_element_type=jnp.float32)       # (tm, dim)

    q_ref[...] = q.astype(q_ref.dtype)
    idx_ref[...] = idx2d.astype(jnp.int32)

    # Per-tile partial sum of squared errors, written to an aligned lane-dense
    # slab.  No resident accumulator -> grid axis can be "parallel" (v7x).
    err = q - x
    partial = jnp.sum(err * err)                                       # scalar
    sse_ref[...] = jnp.broadcast_to(partial, sse_ref.shape)            # (1, 8, 128)


def quantize_forward(x, embed, *, tm=1024):
    """x: (..., dim) float32 (channel-last).  embed: (dim, n_embed) float32."""
    dim = x.shape[-1]
    n_embed = embed.shape[1]
    flat = x.reshape(-1, dim)
    N = flat.shape[0]
    tm = min(tm, N)
    assert N % tm == 0, "N = prod(leading dims) must be a multiple of the row tile"
    grid_n = N // tm

    # Codebook-invariant work hoisted out of the grid loop.
    embed_f32 = embed.astype(jnp.float32)
    embed_t = embed_f32.T                                        # (n_embed, dim)
    col_sq = jnp.sum(embed_f32 * embed_f32, axis=0, keepdims=True)  # (1, n_embed)

    q_flat, idx_flat, sse_part = pl.pallas_call(
        _vq_kernel,
        out_shape=(
            jax.ShapeDtypeStruct((N, dim), x.dtype),
            jax.ShapeDtypeStruct((N, 1), jnp.int32),
            jax.ShapeDtypeStruct((grid_n, 8, 128), jnp.float32),
        ),
        grid_spec=pltpu.PrefetchScalarGridSpec(
            num_scalar_prefetch=0,
            grid=(grid_n,),
            in_specs=[
                pl.BlockSpec((tm, dim), lambda i: (i, 0)),
                pl.BlockSpec((dim, n_embed), lambda i: (0, 0)),    # resident
                pl.BlockSpec((n_embed, dim), lambda i: (0, 0)),    # resident
                pl.BlockSpec((1, n_embed), lambda i: (0, 0)),      # resident
            ],
            out_specs=[
                pl.BlockSpec((tm, dim), lambda i: (i, 0)),
                pl.BlockSpec((tm, 1), lambda i: (i, 0)),
                pl.BlockSpec((1, 8, 128), lambda i: (i, 0, 0)),
            ],
        ),
        compiler_params=pltpu.CompilerParams(
            dimension_semantics=("parallel",)),   # megacore-shardable on v7x
    )(flat, embed_f32, embed_t, col_sq)

    quantize = q_flat.reshape(x.shape)
    embed_ind = idx_flat.reshape(x.shape[:-1])
    sse = jnp.sum(sse_part[:, 0, 0])              # per-tile partials -> scalar
    diff = sse / jnp.float32(N * dim)
    # Straight-through estimator (value identical to `quantize`).
    quantize_st = x + lax.stop_gradient(quantize - x)
    return quantize_st, diff, embed_ind


def _reference(x, embed):
    dim = x.shape[-1]
    flat = x.reshape(-1, dim)
    dist = (jnp.sum(flat ** 2, axis=1, keepdims=True)
            - 2.0 * flat @ embed
            + jnp.sum(embed ** 2, axis=0, keepdims=True))
    idx = jnp.argmin(dist, axis=1)
    q = embed.T[idx].reshape(x.shape)
    diff = jnp.mean((q - x) ** 2)
    return q, diff, idx.reshape(x.shape[:-1])


if __name__ == "__main__":
    dim, n_embed = 32, 128
    B, H, W = 2, 16, 16

    key = jax.random.PRNGKey(0)
    kx, ke = jax.random.split(key)
    x = jax.random.normal(kx, (B, H, W, dim), dtype=jnp.float32)
    embed = jax.random.normal(ke, (dim, n_embed), dtype=jnp.float32)  # torch.randn(dim, n_embed)

    q_ref, diff_ref, idx_ref = _reference(x, embed)

    # Single-tile path (tm capped to N) and multi-tile "parallel" path (tm=128).
    for tile in (1024, 128):
        q, diff, idx = quantize_forward(x, embed, tm=tile)
        jax.block_until_ready((q, diff, idx))
        assert jnp.all(idx == idx_ref), f"embed_ind mismatch (tm={tile})"
        assert jnp.allclose(q, q_ref, atol=1e-5, rtol=1e-5), f"quantize mismatch (tm={tile})"
        assert jnp.allclose(diff, diff_ref, atol=1e-5, rtol=1e-5), f"diff mismatch (tm={tile})"

    print("KERNEL_OK")
</pallas_src>

<mosaic_0001>
module attributes {stable_mosaic.version = 11 : i64} {
  func.func @_vq_kernel(%arg0: i32, %arg1: memref<512x32xf32, #tpu.memory_space<vmem>>, %arg2: memref<32x128xf32, #tpu.memory_space<vmem>>, %arg3: memref<128x32xf32, #tpu.memory_space<vmem>>, %arg4: memref<1x128xf32, #tpu.memory_space<vmem>>, %arg5: memref<512x32xf32, #tpu.memory_space<vmem>>, %arg6: memref<512x1xi32, #tpu.memory_space<vmem>>, %arg7: memref<1x8x128xf32, #tpu.memory_space<vmem>>) attributes {dimension_semantics = [#tpu.dimension_semantics<parallel>], iteration_bounds = array<i64: 1>, scalar_prefetch = 0 : i64, scratch_operands = 0 : i64, tpu.core_type = #tpu.core_type<tc>, window_params = [{transform_indices = @transform_0, window_bounds = array<i64: 512, 32>}, {pipeline_mode = #tpu.pipeline_mode<synchronous>, transform_indices = @transform_1, window_bounds = array<i64: 32, 128>}, {pipeline_mode = #tpu.pipeline_mode<synchronous>, transform_indices = @transform_2, window_bounds = array<i64: 128, 32>}, {pipeline_mode = #tpu.pipeline_mode<synchronous>, transform_indices = @transform_3, window_bounds = array<i64: 1, 128>}, {transform_indices = @transform_4, window_bounds = array<i64: 512, 32>}, {transform_indices = @transform_5, window_bounds = array<i64: 512, 1>}, {transform_indices = @transform_6, window_bounds = array<i64: 1, 8, 128>}]} {
    %c0 = arith.constant 0 : index
    %c0_0 = arith.constant 0 : index
    %0 = vector.load %arg1[%c0, %c0_0] : memref<512x32xf32, #tpu.memory_space<vmem>>, vector<512x32xf32>
    %c0_1 = arith.constant 0 : index
    %c0_2 = arith.constant 0 : index
    %1 = vector.load %arg2[%c0_1, %c0_2] : memref<32x128xf32, #tpu.memory_space<vmem>>, vector<32x128xf32>
    %c0_3 = arith.constant 0 : index
    %c0_4 = arith.constant 0 : index
    %2 = vector.load %arg3[%c0_3, %c0_4] : memref<128x32xf32, #tpu.memory_space<vmem>>, vector<128x32xf32>
    %c0_5 = arith.constant 0 : index
    %c0_6 = arith.constant 0 : index
    %3 = vector.load %arg4[%c0_5, %c0_6] : memref<1x128xf32, #tpu.memory_space<vmem>>, vector<1x128xf32>
    %cst = arith.constant dense<0.000000e+00> : vector<512x128xf32>
    %4 = tpu.matmul %0, %1, %cst {dimension_numbers = #tpu.dot_dimension_numbers<[1], [0], [0], [1], [0, 0, 1, 1], [], []>} : vector<512x32xf32>, vector<32x128xf32>, vector<512x128xf32> -> vector<512x128xf32>
    %cst_7 = arith.constant 2.000000e+00 : f32
    %5 = vector.broadcast %cst_7 : f32 to vector<512x128xf32>
    %6 = arith.mulf %5, %4 : vector<512x128xf32>
    %7 = vector.broadcast %3 : vector<1x128xf32> to vector<512x128xf32>
    %8 = arith.subf %7, %6 : vector<512x128xf32>
    %cst_8 = arith.constant dense<0x7F800000> : vector<512xf32>
    %9 = vector.multi_reduction <minimumf>, %8, %cst_8 [1] : vector<512x128xf32> to vector<512xf32>
    %10 = vector.shape_cast %9 : vector<512xf32> to vector<512x1xf32>
    %11 = tpu.iota {dimensions = array<i32: 1>} : vector<512x128xi32>
    %12 = vector.broadcast %10 : vector<512x1xf32> to vector<512x128xf32>
    %13 = arith.cmpf oeq, %8, %12 : vector<512x128xf32>
    %c128_i32 = arith.constant 128 : i32
    %14 = vector.broadcast %c128_i32 : i32 to vector<512x128xi32>
    %15 = arith.select %13, %11, %14 : vector<512x128xi1>, vector<512x128xi32>
    %cst_9 = arith.constant dense<2147483647> : vector<512xi32>
    %16 = vector.multi_reduction <minsi>, %15, %cst_9 [1] : vector<512x128xi32> to vector<512xi32>
    %17 = vector.shape_cast %16 : vector<512xi32> to vector<512x1xi32>
    %18 = vector.broadcast %17 : vector<512x1xi32> to vector<512x128xi32>
    %19 = arith.cmpi eq, %11, %18 : vector<512x128xi32>
    %20 = arith.extui %19 : vector<512x128xi1> to vector<512x128xi32>
    %21 = arith.sitofp %20 : vector<512x128xi32> to vector<512x128xf32>
    %cst_10 = arith.constant dense<0.000000e+00> : vector<512x32xf32>
    %22 = tpu.matmul %21, %2, %cst_10 {dimension_numbers = #tpu.dot_dimension_numbers<[1], [0], [0], [1], [0, 0, 1, 1], [], []>} : vector<512x128xf32>, vector<128x32xf32>, vector<512x32xf32> -> vector<512x32xf32>
    %c0_11 = arith.constant 0 : index
    %c0_12 = arith.constant 0 : index
    %23 = vector.load %arg5[%c0_11, %c0_12] : memref<512x32xf32, #tpu.memory_space<vmem>>, vector<512x32xf32>
    tpu.vector_store %arg5[%c0_11, %c0_12], %22 {strides = array<i32>} : memref<512x32xf32, #tpu.memory_space<vmem>>, vector<512x32xf32>,
    %c0_13 = arith.constant 0 : index
    %c0_14 = arith.constant 0 : index
    %24 = vector.load %arg6[%c0_13, %c0_14] : memref<512x1xi32, #tpu.memory_space<vmem>>, vector<512x1xi32>
    tpu.vector_store %arg6[%c0_13, %c0_14], %17 {strides = array<i32>} : memref<512x1xi32, #tpu.memory_space<vmem>>, vector<512x1xi32>,
    %25 = arith.subf %22, %0 : vector<512x32xf32>
    %26 = arith.mulf %25, %25 : vector<512x32xf32>
    %27 = vector.shape_cast %26 : vector<512x32xf32> to vector<1x512x32xf32>
    %cst_15 = arith.constant dense<0.000000e+00> : vector<1xf32>
    %28 = vector.multi_reduction <add>, %27, %cst_15 [1, 2] : vector<1x512x32xf32> to vector<1xf32>
    %29 = vector.shape_cast %28 : vector<1xf32> to vector<1x1x1xf32>
    %30 = vector.extract %29[0, 0, 0] : f32 from vector<1x1x1xf32>
    %31 = vector.broadcast %30 : f32 to vector<1x8x128xf32>
    %c0_16 = arith.constant 0 : index
    %c0_17 = arith.constant 0 : index
    %c0_18 = arith.constant 0 : index
    %32 = vector.load %arg7[%c0_16, %c0_17, %c0_18] : memref<1x8x128xf32, #tpu.memory_space<vmem>>, vector<1x8x128xf32>
    tpu.vector_store %arg7[%c0_16, %c0_17, %c0_18], %31 {strides = array<i32>} : memref<1x8x128xf32, #tpu.memory_space<vmem>>, vector<1x8x128xf32>,
    return
  }
  func.func @transform_0(%arg0: i32) -> (i32, i32) {
    %c0_i32 = arith.constant 0 : i32
    %c0_i32_0 = arith.constant 0 : i32
    return %arg0, %c0_i32 : i32, i32
  }
  func.func @transform_1(%arg0: i32) -> (i32, i32) {
    %c0_i32 = arith.constant 0 : i32
    %c0_i32_0 = arith.constant 0 : i32
    %c0_i32_1 = arith.constant 0 : i32
    return %c0_i32, %c0_i32_0 : i32, i32
  }
  func.func @transform_2(%arg0: i32) -> (i32, i32) {
    %c0_i32 = arith.constant 0 : i32
    %c0_i32_0 = arith.constant 0 : i32
    %c0_i32_1 = arith.constant 0 : i32
    return %c0_i32, %c0_i32_0 : i32, i32
  }
  func.func @transform_3(%arg0: i32) -> (i32, i32) {
    %c0_i32 = arith.constant 0 : i32
    %c0_i32_0 = arith.constant 0 : i32
    %c0_i32_1 = arith.constant 0 : i32
    return %c0_i32, %c0_i32_0 : i32, i32
  }
  func.func @transform_4(%arg0: i32) -> (i32, i32) {
    %c0_i32 = arith.constant 0 : i32
    %c0_i32_0 = arith.constant 0 : i32
    return %arg0, %c0_i32 : i32, i32
  }
  func.func @transform_5(%arg0: i32) -> (i32, i32) {
    %c0_i32 = arith.constant 0 : i32
    %c0_i32_0 = arith.constant 0 : i32
    return %arg0, %c0_i32 : i32, i32
  }
  func.func @transform_6(%arg0: i32) -> (i32, i32, i32) {
    %c0_i32 = arith.constant 0 : i32
    %c0_i32_0 = arith.constant 0 : i32
    %c0_i32_1 = arith.constant 0 : i32
    return %arg0, %c0_i32, %c0_i32_0 : i32, i32, i32
  }
}

</mosaic_0001>

<llo_original>
// kernel: tpu_custom_call.1
$region0: #{tpu_custom_call.1}
  #allocation0 [shape = 'u32[]', space=smem, size = 0x4, offset = 0x4, fixed_abs, tag = 'smem constant byte address 0x4 - core index']
  #allocation1 [shape = 'u32[144,128]{1,0:T(1,128)}', space=vmem, size = 0x12000, scoped, tag = 'internal scratch']
  %s0 = inlined_call_operand.vmem [shape: f32[512,32], index: 0, kind: input, shape index: {}]
  %s1 = inlined_call_operand.vmem [shape: f32[32,128], index: 1, kind: input, shape index: {}]
  %s2 = inlined_call_operand.vmem [shape: f32[128,32], index: 2, kind: input, shape index: {}]
  %s3 = inlined_call_operand.vmem [shape: f32[1,128], index: 3, kind: input, shape index: {}]
  %s4 = inlined_call_operand.vmem [shape: f32[512,32], index: 4, kind: output, shape index: {0}]
  %s5 = inlined_call_operand.vmem [shape: s32[512,1], index: 5, kind: output, shape index: {1}]
  %s6 = inlined_call_operand.hbm [shape: f32[1,8,128], index: 6, kind: output, shape index: {2}]
  %7 = xla_tuple %s4, %s5, %s6
  %s8 = sld [smem:[#allocation0]]
  $region42: #{tpu_custom_call.1} parent=0
    _
  %s10 = ssub.s32 1, %s8
  %s11 = scalar_select 0, %s10, %s8
  $region1: #{tpu_custom_call.1} parent=0
    #allocation2 [shape = 'u8[4096]{0}', space=vmem, size = 0x1000, scoped, tag = 'output window, operand 2, single buffered']
    #allocation3 [shape = 's32[1]{0}', space=sflag, size = 0x4, scoped, tag = 'scoped memory for tpu_custom_call.1']
    %12 = vsyncpa [#allocation3], 0
    // Predicated region
    $region2: #{tpu_custom_call.1} parent=1 // pred_check
      _
    $region3: #{tpu_custom_call.1} parent=1 // pred_check_branch
      %14 = sbr.rel (0) target = $region5
    $region4: #{tpu_custom_call.1} parent=1 // pred_region
      _
    $region5: #{tpu_custom_call.1} parent=1 // pred_fallthru
      _
    // Predicated region
    $region6: #{tpu_custom_call.1} parent=1 // pred_check
      _
    $region7: #{tpu_custom_call.1} parent=1 // pred_check_branch
      %16 = sbr.rel (0) target = $region9
    $region8: #{tpu_custom_call.1} parent=1 // pred_region
      _
    $region9: #{tpu_custom_call.1} parent=1 // pred_fallthru
      _
    // Predicated region
    $region10: #{tpu_custom_call.1} parent=1 // pred_check
      _
    $region11: #{tpu_custom_call.1} parent=1 // pred_check_branch
      %18 = sbr.rel (0) target = $region13
    $region12: #{tpu_custom_call.1} parent=1 // pred_region
      _
    $region13: #{tpu_custom_call.1} parent=1 // pred_fallthru
      _
    // Predicated region
    $region14: #{tpu_custom_call.1} parent=1 // pred_check
      _
    $region15: #{tpu_custom_call.1} parent=1 // pred_check_branch
      %20 = sbr.rel (0) target = $region17
    $region16: #{tpu_custom_call.1} parent=1 // pred_region
      _
    $region17: #{tpu_custom_call.1} parent=1 // pred_fallthru
      _
    %v21 = vld [vmem:[%s0] sm:$0xff]
    %v22 = vld [vmem:[%s0 + $0x8] sm:$0xff]
    %v23 = vld [vmem:[%s0 + $0x10] sm:$0xff]
    %v24 = vld [vmem:[%s0 + $0x18] sm:$0xff]
    %v25 = vld [vmem:[%s0 + $0x20] sm:$0xff]
    %v26 = vld [vmem:[%s0 + $0x28] sm:$0xff]
    %v27 = vld [vmem:[%s0 + $0x30] sm:$0xff]
    %v28 = vld [vmem:[%s0 + $0x38] sm:$0xff]
    %v29 = vld [vmem:[%s0 + $0x40] sm:$0xff]
    %v30 = vld [vmem:[%s0 + $0x48] sm:$0xff]
    %v31 = vld [vmem:[%s0 + $0x50] sm:$0xff]
    %v32 = vld [vmem:[%s0 + $0x58] sm:$0xff]
    %v33 = vld [vmem:[%s0 + $0x60] sm:$0xff]
    %v34 = vld [vmem:[%s0 + $0x68] sm:$0xff]
    %v35 = vld [vmem:[%s0 + $0x70] sm:$0xff]
    %v36 = vld [vmem:[%s0 + $0x78] sm:$0xff]
    %v37 = vld [vmem:[%s0 + $0x80] sm:$0xff]
    %v38 = vld [vmem:[%s0 + $0x88] sm:$0xff]
    %v39 = vld [vmem:[%s0 + $0x90] sm:$0xff]
    %v40 = vld [vmem:[%s0 + $0x98] sm:$0xff]
    %v41 = vld [vmem:[%s0 + $0xa0] sm:$0xff]
    %v42 = vld [vmem:[%s0 + $0xa8] sm:$0xff]
    %v43 = vld [vmem:[%s0 + $0xb0] sm:$0xff]
    %v44 = vld [vmem:[%s0 + $0xb8] sm:$0xff]
    %v45 = vld [vmem:[%s0 + $0xc0] sm:$0xff]
    %v46 = vld [vmem:[%s0 + $0xc8] sm:$0xff]
    %v47 = vld [vmem:[%s0 + $0xd0] sm:$0xff]
    %v48 = vld [vmem:[%s0 + $0xd8] sm:$0xff]
    %v49 = vld [vmem:[%s0 + $0xe0] sm:$0xff]
    %v50 = vld [vmem:[%s0 + $0xe8] sm:$0xff]
    %v51 = vld [vmem:[%s0 + $0xf0] sm:$0xff]
    %v52 = vld [vmem:[%s0 + $0xf8] sm:$0xff]
    %v53 = vld [vmem:[%s0 + $0x100] sm:$0xff]
    %v54 = vld [vmem:[%s0 + $0x108] sm:$0xff]
    %v55 = vld [vmem:[%s0 + $0x110] sm:$0xff]
    %v56 = vld [vmem:[%s0 + $0x118] sm:$0xff]
    %v57 = vld [vmem:[%s0 + $0x120] sm:$0xff]
    %v58 = vld [vmem:[%s0 + $0x128] sm:$0xff]
    %v59 = vld [vmem:[%s0 + $0x130] sm:$0xff]
    %v60 = vld [vmem:[%s0 + $0x138] sm:$0xff]
    %v61 = vld [vmem:[%s0 + $0x140] sm:$0xff]
    %v62 = vld [vmem:[%s0 + $0x148] sm:$0xff]
    %v63 = vld [vmem:[%s0 + $0x150] sm:$0xff]
    %v64 = vld [vmem:[%s0 + $0x158] sm:$0xff]
    %v65 = vld [vmem:[%s0 + $0x160] sm:$0xff]
    %v66 = vld [vmem:[%s0 + $0x168] sm:$0xff]
    %v67 = vld [vmem:[%s0 + $0x170] sm:$0xff]
    %v68 = vld [vmem:[%s0 + $0x178] sm:$0xff]
    %v69 = vld [vmem:[%s0 + $0x180] sm:$0xff]
    %v70 = vld [vmem:[%s0 + $0x188] sm:$0xff]
    %v71 = vld [vmem:[%s0 + $0x190] sm:$0xff]
    %v72 = vld [vmem:[%s0 + $0x198] sm:$0xff]
    %v73 = vld [vmem:[%s0 + $0x1a0] sm:$0xff]
    %v74 = vld [vmem:[%s0 + $0x1a8] sm:$0xff]
    %v75 = vld [vmem:[%s0 + $0x1b0] sm:$0xff]
    %v76 = vld [vmem:[%s0 + $0x1b8] sm:$0xff]
    %v77 = vld [vmem:[%s0 + $0x1c0] sm:$0xff]
    %v78 = vld [vmem:[%s0 + $0x1c8] sm:$0xff]
    %v79 = vld [vmem:[%s0 + $0x1d0] sm:$0xff]
    %v80 = vld [vmem:[%s0 + $0x1d8] sm:$0xff]
    %v81 = vld [vmem:[%s0 + $0x1e0] sm:$0xff]
    %v82 = vld [vmem:[%s0 + $0x1e8] sm:$0xff]
    %v83 = vld [vmem:[%s0 + $0x1f0] sm:$0xff]
    %v84 = vld [vmem:[%s0 + $0x1f8] sm:$0xff]
    %v85 = vld [vmem:[%s1] sm:$0xff]
    %v86 = vld [vmem:[%s1 + $0x8] sm:$0xff]
    %v87 = vld [vmem:[%s1 + $0x10] sm:$0xff]
    %v88 = vld [vmem:[%s1 + $0x18] sm:$0xff]
    %v89 = vld [vmem:[%s2] sm:$0xff]
    %v90 = vld [vmem:[%s2 + $0x8] sm:$0xff]
    %v91 = vld [vmem:[%s2 + $0x10] sm:$0xff]
    %v92 = vld [vmem:[%s2 + $0x18] sm:$0xff]
    %v93 = vld [vmem:[%s2 + $0x20] sm:$0xff]
    %v94 = vld [vmem:[%s2 + $0x28] sm:$0xff]
    %v95 = vld [vmem:[%s2 + $0x30] sm:$0xff]
    %v96 = vld [vmem:[%s2 + $0x38] sm:$0xff]
    %v97 = vld [vmem:[%s2 + $0x40] sm:$0xff]
    %v98 = vld [vmem:[%s2 + $0x48] sm:$0xff]
    %v99 = vld [vmem:[%s2 + $0x50] sm:$0xff]
    %v100 = vld [vmem:[%s2 + $0x58] sm:$0xff]
    %v101 = vld [vmem:[%s2 + $0x60] sm:$0xff]
    %v102 = vld [vmem:[%s2 + $0x68] sm:$0xff]
    %v103 = vld [vmem:[%s2 + $0x70] sm:$0xff]
    %v104 = vld [vmem:[%s2 + $0x78] sm:$0xff]
    %v105 = vld [vmem:[%s3] sm:$0x1]
    %vm106 = vcmask 261120
    %v108 = vsel %vm106, %v21, 0
    %v111 = vsel %vm106, %v22, 0
    %v114 = vsel %vm106, %v23, 0
    %v117 = vsel %vm106, %v24, 0
    %v120 = vsel %vm106, %v25, 0
    %v123 = vsel %vm106, %v26, 0
    %v126 = vsel %vm106, %v27, 0
    %v129 = vsel %vm106, %v28, 0
    %v132 = vsel %vm106, %v29, 0
    %v135 = vsel %vm106, %v30, 0
    %v138 = vsel %vm106, %v31, 0
    %v141 = vsel %vm106, %v32, 0
    %v144 = vsel %vm106, %v33, 0
    %v147 = vsel %vm106, %v34, 0
    %v150 = vsel %vm106, %v35, 0
    %v153 = vsel %vm106, %v36, 0
    %v156 = vsel %vm106, %v37, 0
    %v159 = vsel %vm106, %v38, 0
    %v162 = vsel %vm106, %v39, 0
    %v165 = vsel %vm106, %v40, 0
    %v168 = vsel %vm106, %v41, 0
    %v171 = vsel %vm106, %v42, 0
    %v174 = vsel %vm106, %v43, 0
    %v177 = vsel %vm106, %v44, 0
    %v180 = vsel %vm106, %v45, 0
    %v183 = vsel %vm106, %v46, 0
    %v186 = vsel %vm106, %v47, 0
    %v189 = vsel %vm106, %v48, 0
    %v192 = vsel %vm106, %v49, 0
    %v195 = vsel %vm106, %v50, 0
    %v198 = vsel %vm106, %v51, 0
    %v201 = vsel %vm106, %v52, 0
    %v204 = vsel %vm106, %v53, 0
    %v207 = vsel %vm106, %v54, 0
    %v210 = vsel %vm106, %v55, 0
    %v213 = vsel %vm106, %v56, 0
    %v216 = vsel %vm106, %v57, 0
    %v219 = vsel %vm106, %v58, 0
    %v222 = vsel %vm106, %v59, 0
    %v225 = vsel %vm106, %v60, 0
    %v228 = vsel %vm106, %v61, 0
    %v231 = vsel %vm106, %v62, 0
    %v234 = vsel %vm106, %v63, 0
    %v237 = vsel %vm106, %v64, 0
    %v240 = vsel %vm106, %v65, 0
    %v243 = vsel %vm106, %v66, 0
    %v246 = vsel %vm106, %v67, 0
    %v249 = vsel %vm106, %v68, 0
    %v252 = vsel %vm106, %v69, 0
    %v255 = vsel %vm106, %v70, 0
    %v258 = vsel %vm106, %v71, 0
    %v261 = vsel %vm106, %v72, 0
    %v264 = vsel %vm106, %v73, 0
    %v267 = vsel %vm106, %v74, 0
    %v270 = vsel %vm106, %v75, 0
    %v273 = vsel %vm106, %v76, 0
    %v276 = vsel %vm106, %v77, 0
    %v279 = vsel %vm106, %v78, 0
    %v282 = vsel %vm106, %v79, 0
    %v285 = vsel %vm106, %v80, 0
    %v288 = vsel %vm106, %v81, 0
    %v291 = vsel %vm106, %v82, 0
    %v294 = vsel %vm106, %v83, 0
    %v297 = vsel %vm106, %v84, 0
    %299 = vmatprep.subr.mxu0 0.0
    %300 = vmatpush1.msra.mxu0 0.0
    %301 = vmatprep.subr.mxu0 0.0
    %302 = vmatpush1.msra.mxu0 0.0
    %303 = vmatprep.subr.mxu0 0.0
    %304 = vmatpush1.msra.mxu0 0.0
    %305 = vmatprep.subr.mxu0 0.0
    %306 = vmatpush1.msra.mxu0 0.0
    %307 = vmatprep.subr.mxu0 0.0
    %308 = vmatpush1.msra.mxu0 0.0
    %309 = vmatprep.subr.mxu0 0.0
    %310 = vmatpush1.msra.mxu0 0.0
    %311 = vmatprep.subr.mxu0 0.0
    %312 = vmatpush1.msra.mxu0 0.0
    %313 = vmatprep.subr.mxu0 0.0
    %314 = vmatpush1.msra.mxu0 0.0
    %315 = vmatprep.subr.mxu0 0.0
    %316 = vmatpush1.msra.mxu0 0.0
    %317 = vmatprep.subr.mxu0 0.0
    %318 = vmatpush1.msra.mxu0 0.0
    %319 = vmatprep.subr.mxu0 0.0
    %320 = vmatpush1.msra.mxu0 0.0
    %321 = vmatprep.subr.mxu0 0.0
    %322 = vmatpush1.msra.mxu0 0.0
    %323 = vmatprep.subr.mxu0 0.0
    %324 = vmatpush1.msra.mxu0 %v88
    %325 = vmatprep.subr.mxu0 0.0
    %326 = vmatpush1.msra.mxu0 %v87
    %327 = vmatprep.subr.mxu0 0.0
    %328 = vmatpush1.msra.mxu0 %v86
    %329 = vmatprep.subr.mxu0 0.0
    %330 = vmatpush1.msra.mxu0 %v85
    %331 = vmatprep.subr.mxu0 0.0
    %332 = vmatpush2.msra.mxu0 0.0
    %333 = vmatprep.subr.mxu0 0.0
    %334 = vmatpush2.msra.mxu0 0.0
    %335 = vmatprep.subr.mxu0 0.0
    %336 = vmatpush2.msra.mxu0 0.0
    %337 = vmatprep.subr.mxu0 0.0
    %338 = vmatpush2.msra.mxu0 0.0
    %339 = vmatprep.subr.mxu0 0.0
    %340 = vmatpush2.msra.mxu0 0.0
    %341 = vmatprep.subr.mxu0 0.0
    %342 = vmatpush2.msra.mxu0 0.0
    %343 = vmatprep.subr.mxu0 0.0
    %344 = vmatpush2.msra.mxu0 0.0
    %345 = vmatprep.subr.mxu0 0.0
    %346 = vmatpush2.msra.mxu0 0.0
    %347 = vmatprep.subr.mxu0 0.0
    %348 = vmatpush2.msra.mxu0 0.0
    %349 = vmatprep.subr.mxu0 0.0
    %350 = vmatpush2.msra.mxu0 0.0
    %351 = vmatprep.subr.mxu0 0.0
    %352 = vmatpush2.msra.mxu0 0.0
    %353 = vmatprep.subr.mxu0 0.0
    %354 = vmatpush2.msra.mxu0 0.0
    %355 = vmatprep.subr.mxu0 0.0
    %356 = vmatpush2.msra.mxu0 0.0
    %357 = vmatprep.subr.mxu0 0.0
    %358 = vmatpush2.msra.mxu0 0.0
    %359 = vmatprep.subr.mxu0 0.0
    %360 = vmatpush2.msra.mxu0 0.0
    %361 = vmatprep.subr.mxu0 0.0
    %362 = vmatpush2.msra.mxu0 0.0
    %363 = vmatprep.mubr.f32.mxu0 0.0
    %364 = vmatmul.mubr.f32.gmra.mxu0 %v108
    %v365 = vpop.f32.mrf.mxu0
    %v366 = vadd.f32 0.0, %v365
    %v367 = vpop.f32.mrf.mxu0
    %368 = vmatprep.mubr.f32.mxu0 0.0
    %369 = vmatmul.mubr.f32.gmra.mxu0 %v111
    %v370 = vpop.f32.mrf.mxu0
    %v371 = vadd.f32 0.0, %v370
    %v372 = vpop.f32.mrf.mxu0
    %373 = vmatprep.mubr.f32.mxu0 0.0
    %374 = vmatmul.mubr.f32.gmra.mxu0 %v114
    %v375 = vpop.f32.mrf.mxu0
    %v376 = vadd.f32 0.0, %v375
    %v377 = vpop.f32.mrf.mxu0
    %378 = vmatprep.mubr.f32.mxu0 0.0
    %379 = vmatmul.mubr.f32.gmra.mxu0 %v117
    %v380 = vpop.f32.mrf.mxu0
    %v381 = vadd.f32 0.0, %v380
    %v382 = vpop.f32.mrf.mxu0
    %383 = vmatprep.mubr.f32.mxu0 0.0
    %384 = vmatmul.mubr.f32.gmra.mxu0 %v120
    %v385 = vpop.f32.mrf.mxu0
    %v386 = vadd.f32 0.0, %v385
    %v387 = vpop.f32.mrf.mxu0
    %388 = vmatprep.mubr.f32.mxu0 0.0
    %389 = vmatmul.mubr.f32.gmra.mxu0 %v123
    %v390 = vpop.f32.mrf.mxu0
    %v391 = vadd.f32 0.0, %v390
    %v392 = vpop.f32.mrf.mxu0
    %393 = vmatprep.mubr.f32.mxu0 0.0
    %394 = vmatmul.mubr.f32.gmra.mxu0 %v126
    %v395 = vpop.f32.mrf.mxu0
    %v396 = vadd.f32 0.0, %v395
    %v397 = vpop.f32.mrf.mxu0
    %398 = vmatprep.mubr.f32.mxu0 0.0
    %399 = vmatmul.mubr.f32.gmra.mxu0 %v129
    %v400 = vpop.f32.mrf.mxu0
    %v401 = vadd.f32 0.0, %v400
    %v402 = vpop.f32.mrf.mxu0
    %403 = vmatprep.mubr.f32.mxu0 0.0
    %404 = vmatmul.mubr.f32.gmra.mxu0 %v132
    %v405 = vpop.f32.mrf.mxu0
    %v406 = vadd.f32 0.0, %v405
    %v407 = vpop.f32.mrf.mxu0
    %408 = vmatprep.mubr.f32.mxu0 0.0
    %409 = vmatmul.mubr.f32.gmra.mxu0 %v135
    %v410 = vpop.f32.mrf.mxu0
    %v411 = vadd.f32 0.0, %v410
    %v412 = vpop.f32.mrf.mxu0
    %413 = vmatprep.mubr.f32.mxu0 0.0
    %414 = vmatmul.mubr.f32.gmra.mxu0 %v138
    %v415 = vpop.f32.mrf.mxu0
    %v416 = vadd.f32 0.0, %v415
    %v417 = vpop.f32.mrf.mxu0
    %418 = vmatprep.mubr.f32.mxu0 0.0
    %419 = vmatmul.mubr.f32.gmra.mxu0 %v141
    %v420 = vpop.f32.mrf.mxu0
    %v421 = vadd.f32 0.0, %v420
    %v422 = vpop.f32.mrf.mxu0
    %423 = vmatprep.mubr.f32.mxu0 0.0
    %424 = vmatmul.mubr.f32.gmra.mxu0 %v144
    %v425 = vpop.f32.mrf.mxu0
    %v426 = vadd.f32 0.0, %v425
    %v427 = vpop.f32.mrf.mxu0
    %428 = vmatprep.mubr.f32.mxu0 0.0
    %429 = vmatmul.mubr.f32.gmra.mxu0 %v147
    %v430 = vpop.f32.mrf.mxu0
    %v431 = vadd.f32 0.0, %v430
    %v432 = vpop.f32.mrf.mxu0
    %433 = vmatprep.mubr.f32.mxu0 0.0
    %434 = vmatmul.mubr.f32.gmra.mxu0 %v150
    %v435 = vpop.f32.mrf.mxu0
    %v436 = vadd.f32 0.0, %v435
    %v437 = vpop.f32.mrf.mxu0
    %438 = vmatprep.mubr.f32.mxu0 0.0
    %439 = vmatmul.mubr.f32.gmra.mxu0 %v153
    %v440 = vpop.f32.mrf.mxu0
    %v441 = vadd.f32 0.0, %v440
    %v442 = vpop.f32.mrf.mxu0
    %443 = vmatprep.mubr.f32.mxu0 0.0
    %444 = vmatmul.mubr.f32.gmra.mxu0 %v156
    %v445 = vpop.f32.mrf.mxu0
    %v446 = vadd.f32 0.0, %v445
    %v447 = vpop.f32.mrf.mxu0
    %448 = vmatprep.mubr.f32.mxu0 0.0
    %449 = vmatmul.mubr.f32.gmra.mxu0 %v159
    %v450 = vpop.f32.mrf.mxu0
    %v451 = vadd.f32 0.0, %v450
    %v452 = vpop.f32.mrf.mxu0
    %453 = vmatprep.mubr.f32.mxu0 0.0
    %454 = vmatmul.mubr.f32.gmra.mxu0 %v162
    %v455 = vpop.f32.mrf.mxu0
    %v456 = vadd.f32 0.0, %v455
    %v457 = vpop.f32.mrf.mxu0
    %458 = vmatprep.mubr.f32.mxu0 0.0
    %459 = vmatmul.mubr.f32.gmra.mxu0 %v165
    %v460 = vpop.f32.mrf.mxu0
    %v461 = vadd.f32 0.0, %v460
    %v462 = vpop.f32.mrf.mxu0
    %463 = vmatprep.mubr.f32.mxu0 0.0
    %464 = vmatmul.mubr.f32.gmra.mxu0 %v168
    %v465 = vpop.f32.mrf.mxu0
    %v466 = vadd.f32 0.0, %v465
    %v467 = vpop.f32.mrf.mxu0
    %468 = vmatprep.mubr.f32.mxu0 0.0
    %469 = vmatmul.mubr.f32.gmra.mxu0 %v171
    %v470 = vpop.f32.mrf.mxu0
    %v471 = vadd.f32 0.0, %v470
    %v472 = vpop.f32.mrf.mxu0
    %473 = vmatprep.mubr.f32.mxu0 0.0
    %474 = vmatmul.mubr.f32.gmra.mxu0 %v174
    %v475 = vpop.f32.mrf.mxu0
    %v476 = vadd.f32 0.0, %v475
    %v477 = vpop.f32.mrf.mxu0
    %478 = vmatprep.mubr.f32.mxu0 0.0
    %479 = vmatmul.mubr.f32.gmra.mxu0 %v177
    %v480 = vpop.f32.mrf.mxu0
    %v481 = vadd.f32 0.0, %v480
    %v482 = vpop.f32.mrf.mxu0
    %483 = vmatprep.mubr.f32.mxu0 0.0
    %484 = vmatmul.mubr.f32.gmra.mxu0 %v180
    %v485 = vpop.f32.mrf.mxu0
    %v486 = vadd.f32 0.0, %v485
    %v487 = vpop.f32.mrf.mxu0
    %488 = vmatprep.mubr.f32.mxu0 0.0
    %489 = vmatmul.mubr.f32.gmra.mxu0 %v183
    %v490 = vpop.f32.mrf.mxu0
    %v491 = vadd.f32 0.0, %v490
    %v492 = vpop.f32.mrf.mxu0
    %493 = vmatprep.mubr.f32.mxu0 0.0
    %494 = vmatmul.mubr.f32.gmra.mxu0 %v186
    %v495 = vpop.f32.mrf.mxu0
    %v496 = vadd.f32 0.0, %v495
    %v497 = vpop.f32.mrf.mxu0
    %498 = vmatprep.mubr.f32.mxu0 0.0
    %499 = vmatmul.mubr.f32.gmra.mxu0 %v189
    %v500 = vpop.f32.mrf.mxu0
    %v501 = vadd.f32 0.0, %v500
    %v502 = vpop.f32.mrf.mxu0
    %503 = vmatprep.mubr.f32.mxu0 0.0
    %504 = vmatmul.mubr.f32.gmra.mxu0 %v192
    %v505 = vpop.f32.mrf.mxu0
    %v506 = vadd.f32 0.0, %v505
    %v507 = vpop.f32.mrf.mxu0
    %508 = vmatprep.mubr.f32.mxu0 0.0
    %509 = vmatmul.mubr.f32.gmra.mxu0 %v195
    %v510 = vpop.f32.mrf.mxu0
    %v511 = vadd.f32 0.0, %v510
    %v512 = vpop.f32.mrf.mxu0
    %513 = vmatprep.mubr.f32.mxu0 0.0
    %514 = vmatmul.mubr.f32.gmra.mxu0 %v198
    %v515 = vpop.f32.mrf.mxu0
    %v516 = vadd.f32 0.0, %v515
    %v517 = vpop.f32.mrf.mxu0
    %518 = vmatprep.mubr.f32.mxu0 0.0
    %519 = vmatmul.mubr.f32.gmra.mxu0 %v201
    %v520 = vpop.f32.mrf.mxu0
    %v521 = vadd.f32 0.0, %v520
    %v522 = vpop.f32.mrf.mxu0
    %523 = vmatprep.mubr.f32.mxu0 0.0
    %524 = vmatmul.mubr.f32.gmra.mxu0 %v204
    %v525 = vpop.f32.mrf.mxu0
    %v526 = vadd.f32 0.0, %v525
    %v527 = vpop.f32.mrf.mxu0
    %528 = vmatprep.mubr.f32.mxu0 0.0
    %529 = vmatmul.mubr.f32.gmra.mxu0 %v207
    %v530 = vpop.f32.mrf.mxu0
    %v531 = vadd.f32 0.0, %v530
    %v532 = vpop.f32.mrf.mxu0
    %533 = vmatprep.mubr.f32.mxu0 0.0
    %534 = vmatmul.mubr.f32.gmra.mxu0 %v210
    %v535 = vpop.f32.mrf.mxu0
    %v536 = vadd.f32 0.0, %v535
    %v537 = vpop.f32.mrf.mxu0
    %538 = vmatprep.mubr.f32.mxu0 0.0
    %539 = vmatmul.mubr.f32.gmra.mxu0 %v213
    %v540 = vpop.f32.mrf.mxu0
    %v541 = vadd.f32 0.0, %v540
    %v542 = vpop.f32.mrf.mxu0
    %543 = vmatprep.mubr.f32.mxu0 0.0
    %544 = vmatmul.mubr.f32.gmra.mxu0 %v216
    %v545 = vpop.f32.mrf.mxu0
    %v546 = vadd.f32 0.0, %v545
    %v547 = vpop.f32.mrf.mxu0
    %548 = vmatprep.mubr.f32.mxu0 0.0
    %549 = vmatmul.mubr.f32.gmra.mxu0 %v219
    %v550 = vpop.f32.mrf.mxu0
    %v551 = vadd.f32 0.0, %v550
    %v552 = vpop.f32.mrf.mxu0
    %553 = vmatprep.mubr.f32.mxu0 0.0
    %554 = vmatmul.mubr.f32.gmra.mxu0 %v222
    %v555 = vpop.f32.mrf.mxu0
    %v556 = vadd.f32 0.0, %v555
    %v557 = vpop.f32.mrf.mxu0
    %558 = vmatprep.mubr.f32.mxu0 0.0
    %559 = vmatmul.mubr.f32.gmra.mxu0 %v225
    %v560 = vpop.f32.mrf.mxu0
    %v561 = vadd.f32 0.0, %v560
    %v562 = vpop.f32.mrf.mxu0
    %563 = vmatprep.mubr.f32.mxu0 0.0
    %564 = vmatmul.mubr.f32.gmra.mxu0 %v228
    %v565 = vpop.f32.mrf.mxu0
    %v566 = vadd.f32 0.0, %v565
    %v567 = vpop.f32.mrf.mxu0
    %568 = vmatprep.mubr.f32.mxu0 0.0
    %569 = vmatmul.mubr.f32.gmra.mxu0 %v231
    %v570 = vpop.f32.mrf.mxu0
    %v571 = vadd.f32 0.0, %v570
    %v572 = vpop.f32.mrf.mxu0
    %573 = vmatprep.mubr.f32.mxu0 0.0
    %574 = vmatmul.mubr.f32.gmra.mxu0 %v234
    %v575 = vpop.f32.mrf.mxu0
    %v576 = vadd.f32 0.0, %v575
    %v577 = vpop.f32.mrf.mxu0
    %578 = vmatprep.mubr.f32.mxu0 0.0
    %579 = vmatmul.mubr.f32.gmra.mxu0 %v237
    %v580 = vpop.f32.mrf.mxu0
    %v581 = vadd.f32 0.0, %v580
    %v582 = vpop.f32.mrf.mxu0
    %583 = vmatprep.mubr.f32.mxu0 0.0
    %584 = vmatmul.mubr.f32.gmra.mxu0 %v240
    %v585 = vpop.f32.mrf.mxu0
    %v586 = vadd.f32 0.0, %v585
    %v587 = vpop.f32.mrf.mxu0
    %588 = vmatprep.mubr.f32.mxu0 0.0
    %589 = vmatmul.mubr.f32.gmra.mxu0 %v243
    %v590 = vpop.f32.mrf.mxu0
    %v591 = vadd.f32 0.0, %v590
    %v592 = vpop.f32.mrf.mxu0
    %593 = vmatprep.mubr.f32.mxu0 0.0
    %594 = vmatmul.mubr.f32.gmra.mxu0 %v246
    %v595 = vpop.f32.mrf.mxu0
    %v596 = vadd.f32 0.0, %v595
    %v597 = vpop.f32.mrf.mxu0
    %598 = vmatprep.mubr.f32.mxu0 0.0
    %599 = vmatmul.mubr.f32.gmra.mxu0 %v249
    %v600 = vpop.f32.mrf.mxu0
    %v601 = vadd.f32 0.0, %v600
    %v602 = vpop.f32.mrf.mxu0
    %603 = vmatprep.mubr.f32.mxu0 0.0
    %604 = vmatmul.mubr.f32.gmra.mxu0 %v252
    %v605 = vpop.f32.mrf.mxu0
    %v606 = vadd.f32 0.0, %v605
    %v607 = vpop.f32.mrf.mxu0
    %608 = vmatprep.mubr.f32.mxu0 0.0
    %609 = vmatmul.mubr.f32.gmra.mxu0 %v255
    %v610 = vpop.f32.mrf.mxu0
    %v611 = vadd.f32 0.0, %v610
    %v612 = vpop.f32.mrf.mxu0
    %613 = vmatprep.mubr.f32.mxu0 0.0
    %614 = vmatmul.mubr.f32.gmra.mxu0 %v258
    %v615 = vpop.f32.mrf.mxu0
    %v616 = vadd.f32 0.0, %v615
    %v617 = vpop.f32.mrf.mxu0
    %618 = vmatprep.mubr.f32.mxu0 0.0
    %619 = vmatmul.mubr.f32.gmra.mxu0 %v261
    %v620 = vpop.f32.mrf.mxu0
    %v621 = vadd.f32 0.0, %v620
    %v622 = vpop.f32.mrf.mxu0
    %623 = vmatprep.mubr.f32.mxu0 0.0
    %624 = vmatmul.mubr.f32.gmra.mxu0 %v264
    %v625 = vpop.f32.mrf.mxu0
    %v626 = vadd.f32 0.0, %v625
    %v627 = vpop.f32.mrf.mxu0
    %628 = vmatprep.mubr.f32.mxu0 0.0
    %629 = vmatmul.mubr.f32.gmra.mxu0 %v267
    %v630 = vpop.f32.mrf.mxu0
    %v631 = vadd.f32 0.0, %v630
    %v632 = vpop.f32.mrf.mxu0
    %633 = vmatprep.mubr.f32.mxu0 0.0
    %634 = vmatmul.mubr.f32.gmra.mxu0 %v270
    %v635 = vpop.f32.mrf.mxu0
    %v636 = vadd.f32 0.0, %v635
    %v637 = vpop.f32.mrf.mxu0
    %638 = vmatprep.mubr.f32.mxu0 0.0
    %639 = vmatmul.mubr.f32.gmra.mxu0 %v273
    %v640 = vpop.f32.mrf.mxu0
    %v641 = vadd.f32 0.0, %v640
    %v642 = vpop.f32.mrf.mxu0
    %643 = vmatprep.mubr.f32.mxu0 0.0
    %644 = vmatmul.mubr.f32.gmra.mxu0 %v276
    %v645 = vpop.f32.mrf.mxu0
    %v646 = vadd.f32 0.0, %v645
    %v647 = vpop.f32.mrf.mxu0
    %648 = vmatprep.mubr.f32.mxu0 0.0
    %649 = vmatmul.mubr.f32.gmra.mxu0 %v279
    %v650 = vpop.f32.mrf.mxu0
    %v651 = vadd.f32 0.0, %v650
    %v652 = vpop.f32.mrf.mxu0
    %653 = vmatprep.mubr.f32.mxu0 0.0
    %654 = vmatmul.mubr.f32.gmra.mxu0 %v282
    %v655 = vpop.f32.mrf.mxu0
    %v656 = vadd.f32 0.0, %v655
    %v657 = vpop.f32.mrf.mxu0
    %658 = vmatprep.mubr.f32.mxu0 0.0
    %659 = vmatmul.mubr.f32.gmra.mxu0 %v285
    %v660 = vpop.f32.mrf.mxu0
    %v661 = vadd.f32 0.0, %v660
    %v662 = vpop.f32.mrf.mxu0
    %663 = vmatprep.mubr.f32.mxu0 0.0
    %664 = vmatmul.mubr.f32.gmra.mxu0 %v288
    %v665 = vpop.f32.mrf.mxu0
    %v666 = vadd.f32 0.0, %v665
    %v667 = vpop.f32.mrf.mxu0
    %668 = vmatprep.mubr.f32.mxu0 0.0
    %669 = vmatmul.mubr.f32.gmra.mxu0 %v291
    %v670 = vpop.f32.mrf.mxu0
    %v671 = vadd.f32 0.0, %v670
    %v672 = vpop.f32.mrf.mxu0
    %673 = vmatprep.mubr.f32.mxu0 0.0
    %674 = vmatmul.mubr.f32.gmra.mxu0 %v294
    %v675 = vpop.f32.mrf.mxu0
    %v676 = vadd.f32 0.0, %v675
    %v677 = vpop.f32.mrf.mxu0
    %678 = vmatprep.mubr.f32.mxu0 0.0
    %679 = vmatmul.mubr.f32.gmra.mxu0 %v297
    %v680 = vpop.f32.mrf.mxu0
    %v681 = vadd.f32 0.0, %v680
    %v682 = vpop.f32.mrf.mxu0
    %683 = vdwg.mxu0
    %v684 = vmul.f32 %v366, 2.0
    %v685 = vmul.f32 %v371, 2.0
    %v686 = vmul.f32 %v376, 2.0
    %v687 = vmul.f32 %v381, 2.0
    %v688 = vmul.f32 %v386, 2.0
    %v689 = vmul.f32 %v391, 2.0
    %v690 = vmul.f32 %v396, 2.0
    %v691 = vmul.f32 %v401, 2.0
    %v692 = vmul.f32 %v406, 2.0
    %v693 = vmul.f32 %v411, 2.0
    %v694 = vmul.f32 %v416, 2.0
    %v695 = vmul.f32 %v421, 2.0
    %v696 = vmul.f32 %v426, 2.0
    %v697 = vmul.f32 %v431, 2.0
    %v698 = vmul.f32 %v436, 2.0
    %v699 = vmul.f32 %v441, 2.0
    %v700 = vmul.f32 %v446, 2.0
    %v701 = vmul.f32 %v451, 2.0
    %v702 = vmul.f32 %v456, 2.0
    %v703 = vmul.f32 %v461, 2.0
    %v704 = vmul.f32 %v466, 2.0
    %v705 = vmul.f32 %v471, 2.0
    %v706 = vmul.f32 %v476, 2.0
    %v707 = vmul.f32 %v481, 2.0
    %v708 = vmul.f32 %v486, 2.0
    %v709 = vmul.f32 %v491, 2.0
    %v710 = vmul.f32 %v496, 2.0
    %v711 = vmul.f32 %v501, 2.0
    %v712 = vmul.f32 %v506, 2.0
    %v713 = vmul.f32 %v511, 2.0
    %v714 = vmul.f32 %v516, 2.0
    %v715 = vmul.f32 %v521, 2.0
    %v716 = vmul.f32 %v526, 2.0
    %v717 = vmul.f32 %v531, 2.0
    %v718 = vmul.f32 %v536, 2.0
    %v719 = vmul.f32 %v541, 2.0
    %v720 = vmul.f32 %v546, 2.0
    %v721 = vmul.f32 %v551, 2.0
    %v722 = vmul.f32 %v556, 2.0
    %v723 = vmul.f32 %v561, 2.0
    %v724 = vmul.f32 %v566, 2.0
    %v725 = vmul.f32 %v571, 2.0
    %v726 = vmul.f32 %v576, 2.0
    %v727 = vmul.f32 %v581, 2.0
    %v728 = vmul.f32 %v586, 2.0
    %v729 = vmul.f32 %v591, 2.0
    %v730 = vmul.f32 %v596, 2.0
    %v731 = vmul.f32 %v601, 2.0
    %v732 = vmul.f32 %v606, 2.0
    %v733 = vmul.f32 %v611, 2.0
    %v734 = vmul.f32 %v616, 2.0
    %v735 = vmul.f32 %v621, 2.0
    %v736 = vmul.f32 %v626, 2.0
    %v737 = vmul.f32 %v631, 2.0
    %v738 = vmul.f32 %v636, 2.0
    %v739 = vmul.f32 %v641, 2.0
    %v740 = vmul.f32 %v646, 2.0
    %v741 = vmul.f32 %v651, 2.0
    %v742 = vmul.f32 %v656, 2.0
    %v743 = vmul.f32 %v661, 2.0
    %v744 = vmul.f32 %v666, 2.0
    %v745 = vmul.f32 %v671, 2.0
    %v746 = vmul.f32 %v676, 2.0
    %v747 = vmul.f32 %v681, 2.0
    %v749 = vlaneseq
    %v750 = vshrl.u32 %v749, 7
    %v751 = vsub.s32 0, %v750
    %v752 = vrot.slane %v105, %v751
    %v754 = vsub.f32 %v752, %v684
    %v755 = vsub.f32 %v752, %v685
    %v756 = vsub.f32 %v752, %v686
    %v757 = vsub.f32 %v752, %v687
    %v758 = vsub.f32 %v752, %v688
    %v759 = vsub.f32 %v752, %v689
    %v760 = vsub.f32 %v752, %v690
    %v761 = vsub.f32 %v752, %v691
    %v762 = vsub.f32 %v752, %v692
    %v763 = vsub.f32 %v752, %v693
    %v764 = vsub.f32 %v752, %v694
    %v765 = vsub.f32 %v752, %v695
    %v766 = vsub.f32 %v752, %v696
    %v767 = vsub.f32 %v752, %v697
    %v768 = vsub.f32 %v752, %v698
    %v769 = vsub.f32 %v752, %v699
    %v770 = vsub.f32 %v752, %v700
    %v771 = vsub.f32 %v752, %v701
    %v772 = vsub.f32 %v752, %v702
    %v773 = vsub.f32 %v752, %v703
    %v774 = vsub.f32 %v752, %v704
    %v775 = vsub.f32 %v752, %v705
    %v776 = vsub.f32 %v752, %v706
    %v777 = vsub.f32 %v752, %v707
    %v778 = vsub.f32 %v752, %v708
    %v779 = vsub.f32 %v752, %v709
    %v780 = vsub.f32 %v752, %v710
    %v781 = vsub.f32 %v752, %v711
    %v782 = vsub.f32 %v752, %v712
    %v783 = vsub.f32 %v752, %v713
    %v784 = vsub.f32 %v752, %v714
    %v785 = vsub.f32 %v752, %v715
    %v786 = vsub.f32 %v752, %v716
    %v787 = vsub.f32 %v752, %v717
    %v788 = vsub.f32 %v752, %v718
    %v789 = vsub.f32 %v752, %v719
    %v790 = vsub.f32 %v752, %v720
    %v791 = vsub.f32 %v752, %v721
    %v792 = vsub.f32 %v752, %v722
    %v793 = vsub.f32 %v752, %v723
    %v794 = vsub.f32 %v752, %v724
    %v795 = vsub.f32 %v752, %v725
    %v796 = vsub.f32 %v752, %v726
    %v797 = vsub.f32 %v752, %v727
    %v798 = vsub.f32 %v752, %v728
    %v799 = vsub.f32 %v752, %v729
    %v800 = vsub.f32 %v752, %v730
    %v801 = vsub.f32 %v752, %v731
    %v802 = vsub.f32 %v752, %v732
    %v803 = vsub.f32 %v752, %v733
    %v804 = vsub.f32 %v752, %v734
    %v805 = vsub.f32 %v752, %v735
    %v806 = vsub.f32 %v752, %v736
    %v807 = vsub.f32 %v752, %v737
    %v808 = vsub.f32 %v752, %v738
    %v809 = vsub.f32 %v752, %v739
    %v810 = vsub.f32 %v752, %v740
    %v811 = vsub.f32 %v752, %v741
    %v812 = vsub.f32 %v752, %v742
    %v813 = vsub.f32 %v752, %v743
    %v814 = vsub.f32 %v752, %v744
    %v815 = vsub.f32 %v752, %v745
    %v816 = vsub.f32 %v752, %v746
    %v817 = vsub.f32 %v752, %v747
    %818 = vmin.xlane.f32.xlu0 %v754
    %v819 = vpop.xlane.xlu0 %818
    %820 = vmin.xlane.f32.xlu0 %v755
    %v821 = vpop.xlane.xlu0 %820
    %822 = vmin.xlane.f32.xlu0 %v756
    %v823 = vpop.xlane.xlu0 %822
    %824 = vmin.xlane.f32.xlu0 %v757
    %v825 = vpop.xlane.xlu0 %824
    %826 = vmin.xlane.f32.xlu0 %v758
    %v827 = vpop.xlane.xlu0 %826
    %828 = vmin.xlane.f32.xlu0 %v759
    %v829 = vpop.xlane.xlu0 %828
    %830 = vmin.xlane.f32.xlu0 %v760
    %v831 = vpop.xlane.xlu0 %830
    %832 = vmin.xlane.f32.xlu0 %v761
    %v833 = vpop.xlane.xlu0 %832
    %834 = vmin.xlane.f32.xlu0 %v762
    %v835 = vpop.xlane.xlu0 %834
    %836 = vmin.xlane.f32.xlu0 %v763
    %v837 = vpop.xlane.xlu0 %836
    %838 = vmin.xlane.f32.xlu0 %v764
    %v839 = vpop.xlane.xlu0 %838
    %840 = vmin.xlane.f32.xlu0 %v765
    %v841 = vpop.xlane.xlu0 %840
    %842 = vmin.xlane.f32.xlu0 %v766
    %v843 = vpop.xlane.xlu0 %842
    %844 = vmin.xlane.f32.xlu0 %v767
    %v845 = vpop.xlane.xlu0 %844
    %846 = vmin.xlane.f32.xlu0 %v768
    %v847 = vpop.xlane.xlu0 %846
    %848 = vmin.xlane.f32.xlu0 %v769
    %v849 = vpop.xlane.xlu0 %848
    %850 = vmin.xlane.f32.xlu0 %v770
    %v851 = vpop.xlane.xlu0 %850
    %852 = vmin.xlane.f32.xlu0 %v771
    %v853 = vpop.xlane.xlu0 %852
    %854 = vmin.xlane.f32.xlu0 %v772
    %v855 = vpop.xlane.xlu0 %854
    %856 = vmin.xlane.f32.xlu0 %v773
    %v857 = vpop.xlane.xlu0 %856
    %858 = vmin.xlane.f32.xlu0 %v774
    %v859 = vpop.xlane.xlu0 %858
    %860 = vmin.xlane.f32.xlu0 %v775
    %v861 = vpop.xlane.xlu0 %860
    %862 = vmin.xlane.f32.xlu0 %v776
    %v863 = vpop.xlane.xlu0 %862
    %864 = vmin.xlane.f32.xlu0 %v777
    %v865 = vpop.xlane.xlu0 %864
    %866 = vmin.xlane.f32.xlu0 %v778
    %v867 = vpop.xlane.xlu0 %866
    %868 = vmin.xlane.f32.xlu0 %v779
    %v869 = vpop.xlane.xlu0 %868
    %870 = vmin.xlane.f32.xlu0 %v780
    %v871 = vpop.xlane.xlu0 %870
    %872 = vmin.xlane.f32.xlu0 %v781
    %v873 = vpop.xlane.xlu0 %872
    %874 = vmin.xlane.f32.xlu0 %v782
    %v875 = vpop.xlane.xlu0 %874
    %876 = vmin.xlane.f32.xlu0 %v783
    %v877 = vpop.xlane.xlu0 %876
    %878 = vmin.xlane.f32.xlu0 %v784
    %v879 = vpop.xlane.xlu0 %878
    %880 = vmin.xlane.f32.xlu0 %v785
    %v881 = vpop.xlane.xlu0 %880
    %882 = vmin.xlane.f32.xlu0 %v786
    %v883 = vpop.xlane.xlu0 %882
    %884 = vmin.xlane.f32.xlu0 %v787
    %v885 = vpop.xlane.xlu0 %884
    %886 = vmin.xlane.f32.xlu0 %v788
    %v887 = vpop.xlane.xlu0 %886
    %888 = vmin.xlane.f32.xlu0 %v789
    %v889 = vpop.xlane.xlu0 %888
    %890 = vmin.xlane.f32.xlu0 %v790
    %v891 = vpop.xlane.xlu0 %890
    %892 = vmin.xlane.f32.xlu0 %v791
    %v893 = vpop.xlane.xlu0 %892
    %894 = vmin.xlane.f32.xlu0 %v792
    %v895 = vpop.xlane.xlu0 %894
    %896 = vmin.xlane.f32.xlu0 %v793
    %v897 = vpop.xlane.xlu0 %896
    %898 = vmin.xlane.f32.xlu0 %v794
    %v899 = vpop.xlane.xlu0 %898
    %900 = vmin.xlane.f32.xlu0 %v795
    %v901 = vpop.xlane.xlu0 %900
    %902 = vmin.xlane.f32.xlu0 %v796
    %v903 = vpop.xlane.xlu0 %902
    %904 = vmin.xlane.f32.xlu0 %v797
    %v905 = vpop.xlane.xlu0 %904
    %906 = vmin.xlane.f32.xlu0 %v798
    %v907 = vpop.xlane.xlu0 %906
    %908 = vmin.xlane.f32.xlu0 %v799
    %v909 = vpop.xlane.xlu0 %908
    %910 = vmin.xlane.f32.xlu0 %v800
    %v911 = vpop.xlane.xlu0 %910
    %912 = vmin.xlane.f32.xlu0 %v801
    %v913 = vpop.xlane.xlu0 %912
    %914 = vmin.xlane.f32.xlu0 %v802
    %v915 = vpop.xlane.xlu0 %914
    %916 = vmin.xlane.f32.xlu0 %v803
    %v917 = vpop.xlane.xlu0 %916
    %918 = vmin.xlane.f32.xlu0 %v804
    %v919 = vpop.xlane.xlu0 %918
    %920 = vmin.xlane.f32.xlu0 %v805
    %v921 = vpop.xlane.xlu0 %920
    %922 = vmin.xlane.f32.xlu0 %v806
    %v923 = vpop.xlane.xlu0 %922
    %924 = vmin.xlane.f32.xlu0 %v807
    %v925 = vpop.xlane.xlu0 %924
    %926 = vmin.xlane.f32.xlu0 %v808
    %v927 = vpop.xlane.xlu0 %926
    %928 = vmin.xlane.f32.xlu0 %v809
    %v929 = vpop.xlane.xlu0 %928
    %930 = vmin.xlane.f32.xlu0 %v810
    %v931 = vpop.xlane.xlu0 %930
    %932 = vmin.xlane.f32.xlu0 %v811
    %v933 = vpop.xlane.xlu0 %932
    %934 = vmin.xlane.f32.xlu0 %v812
    %v935 = vpop.xlane.xlu0 %934
    %936 = vmin.xlane.f32.xlu0 %v813
    %v937 = vpop.xlane.xlu0 %936
    %938 = vmin.xlane.f32.xlu0 %v814
    %v939 = vpop.xlane.xlu0 %938
    %940 = vmin.xlane.f32.xlu0 %v815
    %v941 = vpop.xlane.xlu0 %940
    %942 = vmin.xlane.f32.xlu0 %v816
    %v943 = vpop.xlane.xlu0 %942
    %944 = vmin.xlane.f32.xlu0 %v817
    %v945 = vpop.xlane.xlu0 %944
    %v946 = vlaneseq
    %v947 = vand.u32 %v946, 127
    %vm948 = vcmp.eq.f32.partialorder %v754, %v819
    %vm949 = vcmp.eq.f32.partialorder %v755, %v821
    %vm950 = vcmp.eq.f32.partialorder %v756, %v823
    %vm951 = vcmp.eq.f32.partialorder %v757, %v825
    %vm952 = vcmp.eq.f32.partialorder %v758, %v827
    %vm953 = vcmp.eq.f32.partialorder %v759, %v829
    %vm954 = vcmp.eq.f32.partialorder %v760, %v831
    %vm955 = vcmp.eq.f32.partialorder %v761, %v833
    %vm956 = vcmp.eq.f32.partialorder %v762, %v835
    %vm957 = vcmp.eq.f32.partialorder %v763, %v837
    %vm958 = vcmp.eq.f32.partialorder %v764, %v839
    %vm959 = vcmp.eq.f32.partialorder %v765, %v841
    %vm960 = vcmp.eq.f32.partialorder %v766, %v843
    %vm961 = vcmp.eq.f32.partialorder %v767, %v845
    %vm962 = vcmp.eq.f32.partialorder %v768, %v847
    %vm963 = vcmp.eq.f32.partialorder %v769, %v849
    %vm964 = vcmp.eq.f32.partialorder %v770, %v851
    %vm965 = vcmp.eq.f32.partialorder %v771, %v853
    %vm966 = vcmp.eq.f32.partialorder %v772, %v855
    %vm967 = vcmp.eq.f32.partialorder %v773, %v857
    %vm968 = vcmp.eq.f32.partialorder %v774, %v859
    %vm969 = vcmp.eq.f32.partialorder %v775, %v861
    %vm970 = vcmp.eq.f32.partialorder %v776, %v863
    %vm971 = vcmp.eq.f32.partialorder %v777, %v865
    %vm972 = vcmp.eq.f32.partialorder %v778, %v867
    %vm973 = vcmp.eq.f32.partialorder %v779, %v869
    %vm974 = vcmp.eq.f32.partialorder %v780, %v871
    %vm975 = vcmp.eq.f32.partialorder %v781, %v873
    %vm976 = vcmp.eq.f32.partialorder %v782, %v875
    %vm977 = vcmp.eq.f32.partialorder %v783, %v877
    %vm978 = vcmp.eq.f32.partialorder %v784, %v879
    %vm979 = vcmp.eq.f32.partialorder %v785, %v881
    %vm980 = vcmp.eq.f32.partialorder %v786, %v883
    %vm981 = vcmp.eq.f32.partialorder %v787, %v885
    %vm982 = vcmp.eq.f32.partialorder %v788, %v887
    %vm983 = vcmp.eq.f32.partialorder %v789, %v889
    %vm984 = vcmp.eq.f32.partialorder %v790, %v891
    %vm985 = vcmp.eq.f32.partialorder %v791, %v893
    %vm986 = vcmp.eq.f32.partialorder %v792, %v895
    %vm987 = vcmp.eq.f32.partialorder %v793, %v897
    %vm988 = vcmp.eq.f32.partialorder %v794, %v899
    %vm989 = vcmp.eq.f32.partialorder %v795, %v901
    %vm990 = vcmp.eq.f32.partialorder %v796, %v903
    %vm991 = vcmp.eq.f32.partialorder %v797, %v905
    %vm992 = vcmp.eq.f32.partialorder %v798, %v907
    %vm993 = vcmp.eq.f32.partialorder %v799, %v909
    %vm994 = vcmp.eq.f32.partialorder %v800, %v911
    %vm995 = vcmp.eq.f32.partialorder %v801, %v913
    %vm996 = vcmp.eq.f32.partialorder %v802, %v915
    %vm997 = vcmp.eq.f32.partialorder %v803, %v917
    %vm998 = vcmp.eq.f32.partialorder %v804, %v919
    %vm999 = vcmp.eq.f32.partialorder %v805, %v921
    %vm1000 = vcmp.eq.f32.partialorder %v806, %v923
    %vm1001 = vcmp.eq.f32.partialorder %v807, %v925
    %vm1002 = vcmp.eq.f32.partialorder %v808, %v927
    %vm1003 = vcmp.eq.f32.partialorder %v809, %v929
    %vm1004 = vcmp.eq.f32.partialorder %v810, %v931
    %vm1005 = vcmp.eq.f32.partialorder %v811, %v933
    %vm1006 = vcmp.eq.f32.partialorder %v812, %v935
    %vm1007 = vcmp.eq.f32.partialorder %v813, %v937
    %vm1008 = vcmp.eq.f32.partialorder %v814, %v939
    %vm1009 = vcmp.eq.f32.partialorder %v815, %v941
    %vm1010 = vcmp.eq.f32.partialorder %v816, %v943
    %vm1011 = vcmp.eq.f32.partialorder %v817, %v945
    %v1012 = vsel %vm948, %v947, 128
    %v1013 = vsel %vm949, %v947, 128
    %v1014 = vsel %vm950, %v947, 128
    %v1015 = vsel %vm951, %v947, 128
    %v1016 = vsel %vm952, %v947, 128
    %v1017 = vsel %vm953, %v947, 128
    %v1018 = vsel %vm954, %v947, 128
    %v1019 = vsel %vm955, %v947, 128
    %v1020 = vsel %vm956, %v947, 128
    %v1021 = vsel %vm957, %v947, 128
    %v1022 = vsel %vm958, %v947, 128
    %v1023 = vsel %vm959, %v947, 128
    %v1024 = vsel %vm960, %v947, 128
    %v1025 = vsel %vm961, %v947, 128
    %v1026 = vsel %vm962, %v947, 128
    %v1027 = vsel %vm963, %v947, 128
    %v1028 = vsel %vm964, %v947, 128
    %v1029 = vsel %vm965, %v947, 128
    %v1030 = vsel %vm966, %v947, 128
    %v1031 = vsel %vm967, %v947, 128
    %v1032 = vsel %vm968, %v947, 128
    %v1033 = vsel %vm969, %v947, 128
    %v1034 = vsel %vm970, %v947, 128
    %v1035 = vsel %vm971, %v947, 128
    %v1036 = vsel %vm972, %v947, 128
    %v1037 = vsel %vm973, %v947, 128
    %v1038 = vsel %vm974, %v947, 128
    %v1039 = vsel %vm975, %v947, 128
    %v1040 = vsel %vm976, %v947, 128
    %v1041 = vsel %vm977, %v947, 128
    %v1042 = vsel %vm978, %v947, 128
    %v1043 = vsel %vm979, %v947, 128
    %v1044 = vsel %vm980, %v947, 128
    %v1045 = vsel %vm981, %v947, 128
    %v1046 = vsel %vm982, %v947, 128
    %v1047 = vsel %vm983, %v947, 128
    %v1048 = vsel %vm984, %v947, 128
    %v1049 = vsel %vm985, %v947, 128
    %v1050 = vsel %vm986, %v947, 128
    %v1051 = vsel %vm987, %v947, 128
    %v1052 = vsel %vm988, %v947, 128
    %v1053 = vsel %vm989, %v947, 128
    %v1054 = vsel %vm990, %v947, 128
    %v1055 = vsel %vm991, %v947, 128
    %v1056 = vsel %vm992, %v947, 128
    %v1057 = vsel %vm993, %v947, 128
    %v1058 = vsel %vm994, %v947, 128
    %v1059 = vsel %vm995, %v947, 128
    %v1060 = vsel %vm996, %v947, 128
    %v1061 = vsel %vm997, %v947, 128
    %v1062 = vsel %vm998, %v947, 128
    %v1063 = vsel %vm999, %v947, 128
    %v1064 = vsel %vm1000, %v947, 128
    %v1065 = vsel %vm1001, %v947, 128
    %v1066 = vsel %vm1002, %v947, 128
    %v1067 = vsel %vm1003, %v947, 128
    %v1068 = vsel %vm1004, %v947, 128
    %v1069 = vsel %vm1005, %v947, 128
    %v1070 = vsel %vm1006, %v947, 128
    %v1071 = vsel %vm1007, %v947, 128
    %v1072 = vsel %vm1008, %v947, 128
    %v1073 = vsel %vm1009, %v947, 128
    %v1074 = vsel %vm1010, %v947, 128
    %v1075 = vsel %vm1011, %v947, 128
    %v1076 = vand.u32 %v1012, 65535
    %v1077 = vshra.s32 %v1012, 16
    %v1078 = vcvt.s32.f32 %v1076
    %v1079 = vcvt.s32.f32 %v1077
    %1080 = vmin.xlane.f32.xlu0 %v1079
    %v1081 = vpop.xlane.xlu0 %1080
    %vm1082 = vcmp.eq.f32.partialorder %v1079, %v1081
    %v1083 = vsel %vm1082, %v1078, inf
    %1084 = vmin.xlane.f32.xlu0 %v1083
    %v1085 = vpop.xlane.xlu0 %1084
    %v1086 = vcvt.f32.s32 %v1085
    %v1087 = vcvt.f32.s32 %v1081
    %v1088 = vshll.u32 %v1087, 16
    %v1089 = vadd.s32 %v1088, %v1086
    %v1090 = vand.u32 %v1013, 65535
    %v1091 = vshra.s32 %v1013, 16
    %v1092 = vcvt.s32.f32 %v1090
    %v1093 = vcvt.s32.f32 %v1091
    %1094 = vmin.xlane.f32.xlu0 %v1093
    %v1095 = vpop.xlane.xlu0 %1094
    %vm1096 = vcmp.eq.f32.partialorder %v1093, %v1095
    %v1097 = vsel %vm1096, %v1092, inf
    %1098 = vmin.xlane.f32.xlu0 %v1097
    %v1099 = vpop.xlane.xlu0 %1098
    %v1100 = vcvt.f32.s32 %v1099
    %v1101 = vcvt.f32.s32 %v1095
    %v1102 = vshll.u32 %v1101, 16
    %v1103 = vadd.s32 %v1102, %v1100
    %v1104 = vand.u32 %v1014, 65535
    %v1105 = vshra.s32 %v1014, 16
    %v1106 = vcvt.s32.f32 %v1104
    %v1107 = vcvt.s32.f32 %v1105
    %1108 = vmin.xlane.f32.xlu0 %v1107
    %v1109 = vpop.xlane.xlu0 %1108
    %vm1110 = vcmp.eq.f32.partialorder %v1107, %v1109
    %v1111 = vsel %vm1110, %v1106, inf
    %1112 = vmin.xlane.f32.xlu0 %v1111
    %v1113 = vpop.xlane.xlu0 %1112
    %v1114 = vcvt.f32.s32 %v1113
    %v1115 = vcvt.f32.s32 %v1109
    %v1116 = vshll.u32 %v1115, 16
    %v1117 = vadd.s32 %v1116, %v1114
    %v1118 = vand.u32 %v1015, 65535
    %v1119 = vshra.s32 %v1015, 16
    %v1120 = vcvt.s32.f32 %v1118
    %v1121 = vcvt.s32.f32 %v1119
    %1122 = vmin.xlane.f32.xlu0 %v1121
    %v1123 = vpop.xlane.xlu0 %1122
    %vm1124 = vcmp.eq.f32.partialorder %v1121, %v1123
    %v1125 = vsel %vm1124, %v1120, inf
    %1126 = vmin.xlane.f32.xlu0 %v1125
    %v1127 = vpop.xlane.xlu0 %1126
    %v1128 = vcvt.f32.s32 %v1127
    %v1129 = vcvt.f32.s32 %v1123
    %v1130 = vshll.u32 %v1129, 16
    %v1131 = vadd.s32 %v1130, %v1128
    %v1132 = vand.u32 %v1016, 65535
    %v1133 = vshra.s32 %v1016, 16
    %v1134 = vcvt.s32.f32 %v1132
    %v1135 = vcvt.s32.f32 %v1133
    %1136 = vmin.xlane.f32.xlu0 %v1135
    %v1137 = vpop.xlane.xlu0 %1136
    %vm1138 = vcmp.eq.f32.partialorder %v1135, %v1137
    %v1139 = vsel %vm1138, %v1134, inf
    %1140 = vmin.xlane.f32.xlu0 %v1139
    %v1141 = vpop.xlane.xlu0 %1140
    %v1142 = vcvt.f32.s32 %v1141
    %v1143 = vcvt.f32.s32 %v1137
    %v1144 = vshll.u32 %v1143, 16
    %v1145 = vadd.s32 %v1144, %v1142
    %v1146 = vand.u32 %v1017, 65535
    %v1147 = vshra.s32 %v1017, 16
    %v1148 = vcvt.s32.f32 %v1146
    %v1149 = vcvt.s32.f32 %v1147
    %1150 = vmin.xlane.f32.xlu0 %v1149
    %v1151 = vpop.xlane.xlu0 %1150
    %vm1152 = vcmp.eq.f32.partialorder %v1149, %v1151
    %v1153 = vsel %vm1152, %v1148, inf
    %1154 = vmin.xlane.f32.xlu0 %v1153
    %v1155 = vpop.xlane.xlu0 %1154
    %v1156 = vcvt.f32.s32 %v1155
    %v1157 = vcvt.f32.s32 %v1151
    %v1158 = vshll.u32 %v1157, 16
    %v1159 = vadd.s32 %v1158, %v1156
    %v1160 = vand.u32 %v1018, 65535
    %v1161 = vshra.s32 %v1018, 16
    %v1162 = vcvt.s32.f32 %v1160
    %v1163 = vcvt.s32.f32 %v1161
    %1164 = vmin.xlane.f32.xlu0 %v1163
    %v1165 = vpop.xlane.xlu0 %1164
    %vm1166 = vcmp.eq.f32.partialorder %v1163, %v1165
    %v1167 = vsel %vm1166, %v1162, inf
    %1168 = vmin.xlane.f32.xlu0 %v1167
    %v1169 = vpop.xlane.xlu0 %1168
    %v1170 = vcvt.f32.s32 %v1169
    %v1171 = vcvt.f32.s32 %v1165
    %v1172 = vshll.u32 %v1171, 16
    %v1173 = vadd.s32 %v1172, %v1170
    %v1174 = vand.u32 %v1019, 65535
    %v1175 = vshra.s32 %v1019, 16
    %v1176 = vcvt.s32.f32 %v1174
    %v1177 = vcvt.s32.f32 %v1175
    %1178 = vmin.xlane.f32.xlu0 %v1177
    %v1179 = vpop.xlane.xlu0 %1178
    %vm1180 = vcmp.eq.f32.partialorder %v1177, %v1179
    %v1181 = vsel %vm1180, %v1176, inf
    %1182 = vmin.xlane.f32.xlu0 %v1181
    %v1183 = vpop.xlane.xlu0 %1182
    %v1184 = vcvt.f32.s32 %v1183
    %v1185 = vcvt.f32.s32 %v1179
    %v1186 = vshll.u32 %v1185, 16
    %v1187 = vadd.s32 %v1186, %v1184
    %v1188 = vand.u32 %v1020, 65535
    %v1189 = vshra.s32 %v1020, 16
    %v1190 = vcvt.s32.f32 %v1188
    %v1191 = vcvt.s32.f32 %v1189
    %1192 = vmin.xlane.f32.xlu0 %v1191
    %v1193 = vpop.xlane.xlu0 %1192
    %vm1194 = vcmp.eq.f32.partialorder %v1191, %v1193
    %v1195 = vsel %vm1194, %v1190, inf
    %1196 = vmin.xlane.f32.xlu0 %v1195
    %v1197 = vpop.xlane.xlu0 %1196
    %v1198 = vcvt.f32.s32 %v1197
    %v1199 = vcvt.f32.s32 %v1193
    %v1200 = vshll.u32 %v1199, 16
    %v1201 = vadd.s32 %v1200, %v1198
    %v1202 = vand.u32 %v1021, 65535
    %v1203 = vshra.s32 %v1021, 16
    %v1204 = vcvt.s32.f32 %v1202
    %v1205 = vcvt.s32.f32 %v1203
    %1206 = vmin.xlane.f32.xlu0 %v1205
    %v1207 = vpop.xlane.xlu0 %1206
    %vm1208 = vcmp.eq.f32.partialorder %v1205, %v1207
    %v1209 = vsel %vm1208, %v1204, inf
    %1210 = vmin.xlane.f32.xlu0 %v1209
    %v1211 = vpop.xlane.xlu0 %1210
    %v1212 = vcvt.f32.s32 %v1211
    %v1213 = vcvt.f32.s32 %v1207
    %v1214 = vshll.u32 %v1213, 16
    %v1215 = vadd.s32 %v1214, %v1212
    %v1216 = vand.u32 %v1022, 65535
    %v1217 = vshra.s32 %v1022, 16
    %v1218 = vcvt.s32.f32 %v1216
    %v1219 = vcvt.s32.f32 %v1217
    %1220 = vmin.xlane.f32.xlu0 %v1219
    %v1221 = vpop.xlane.xlu0 %1220
    %vm1222 = vcmp.eq.f32.partialorder %v1219, %v1221
    %v1223 = vsel %vm1222, %v1218, inf
    %1224 = vmin.xlane.f32.xlu0 %v1223
    %v1225 = vpop.xlane.xlu0 %1224
    %v1226 = vcvt.f32.s32 %v1225
    %v1227 = vcvt.f32.s32 %v1221
    %v1228 = vshll.u32 %v1227, 16
    %v1229 = vadd.s32 %v1228, %v1226
    %v1230 = vand.u32 %v1023, 65535
    %v1231 = vshra.s32 %v1023, 16
    %v1232 = vcvt.s32.f32 %v1230
    %v1233 = vcvt.s32.f32 %v1231
    %1234 = vmin.xlane.f32.xlu0 %v1233
    %v1235 = vpop.xlane.xlu0 %1234
    %vm1236 = vcmp.eq.f32.partialorder %v1233, %v1235
    %v1237 = vsel %vm1236, %v1232, inf
    %1238 = vmin.xlane.f32.xlu0 %v1237
    %v1239 = vpop.xlane.xlu0 %1238
    %v1240 = vcvt.f32.s32 %v1239
    %v1241 = vcvt.f32.s32 %v1235
    %v1242 = vshll.u32 %v1241, 16
    %v1243 = vadd.s32 %v1242, %v1240
    %v1244 = vand.u32 %v1024, 65535
    %v1245 = vshra.s32 %v1024, 16
    %v1246 = vcvt.s32.f32 %v1244
    %v1247 = vcvt.s32.f32 %v1245
    %1248 = vmin.xlane.f32.xlu0 %v1247
    %v1249 = vpop.xlane.xlu0 %1248
    %vm1250 = vcmp.eq.f32.partialorder %v1247, %v1249
    %v1251 = vsel %vm1250, %v1246, inf
    %1252 = vmin.xlane.f32.xlu0 %v1251
    %v1253 = vpop.xlane.xlu0 %1252
    %v1254 = vcvt.f32.s32 %v1253
    %v1255 = vcvt.f32.s32 %v1249
    %v1256 = vshll.u32 %v1255, 16
    %v1257 = vadd.s32 %v1256, %v1254
    %v1258 = vand.u32 %v1025, 65535
    %v1259 = vshra.s32 %v1025, 16
    %v1260 = vcvt.s32.f32 %v1258
    %v1261 = vcvt.s32.f32 %v1259
    %1262 = vmin.xlane.f32.xlu0 %v1261
    %v1263 = vpop.xlane.xlu0 %1262
    %vm1264 = vcmp.eq.f32.partialorder %v1261, %v1263
    %v1265 = vsel %vm1264, %v1260, inf
    %1266 = vmin.xlane.f32.xlu0 %v1265
    %v1267 = vpop.xlane.xlu0 %1266
    %v1268 = vcvt.f32.s32 %v1267
    %v1269 = vcvt.f32.s32 %v1263
    %v1270 = vshll.u32 %v1269, 16
    %v1271 = vadd.s32 %v1270, %v1268
    %v1272 = vand.u32 %v1026, 65535
    %v1273 = vshra.s32 %v1026, 16
    %v1274 = vcvt.s32.f32 %v1272
    %v1275 = vcvt.s32.f32 %v1273
    %1276 = vmin.xlane.f32.xlu0 %v1275
    %v1277 = vpop.xlane.xlu0 %1276
    %vm1278 = vcmp.eq.f32.partialorder %v1275, %v1277
    %v1279 = vsel %vm1278, %v1274, inf
    %1280 = vmin.xlane.f32.xlu0 %v1279
    %v1281 = vpop.xlane.xlu0 %1280
    %v1282 = vcvt.f32.s32 %v1281
    %v1283 = vcvt.f32.s32 %v1277
    %v1284 = vshll.u32 %v1283, 16
    %v1285 = vadd.s32 %v1284, %v1282
    %v1286 = vand.u32 %v1027, 65535
    %v1287 = vshra.s32 %v1027, 16
    %v1288 = vcvt.s32.f32 %v1286
    %v1289 = vcvt.s32.f32 %v1287
    %1290 = vmin.xlane.f32.xlu0 %v1289
    %v1291 = vpop.xlane.xlu0 %1290
    %vm1292 = vcmp.eq.f32.partialorder %v1289, %v1291
    %v1293 = vsel %vm1292, %v1288, inf
    %1294 = vmin.xlane.f32.xlu0 %v1293
    %v1295 = vpop.xlane.xlu0 %1294
    %v1296 = vcvt.f32.s32 %v1295
    %v1297 = vcvt.f32.s32 %v1291
    %v1298 = vshll.u32 %v1297, 16
    %v1299 = vadd.s32 %v1298, %v1296
    %v1300 = vand.u32 %v1028, 65535
    %v1301 = vshra.s32 %v1028, 16
    %v1302 = vcvt.s32.f32 %v1300
    %v1303 = vcvt.s32.f32 %v1301
    %1304 = vmin.xlane.f32.xlu0 %v1303
    %v1305 = vpop.xlane.xlu0 %1304
    %vm1306 = vcmp.eq.f32.partialorder %v1303, %v1305
    %v1307 = vsel %vm1306, %v1302, inf
    %1308 = vmin.xlane.f32.xlu0 %v1307
    %v1309 = vpop.xlane.xlu0 %1308
    %v1310 = vcvt.f32.s32 %v1309
    %v1311 = vcvt.f32.s32 %v1305
    %v1312 = vshll.u32 %v1311, 16
    %v1313 = vadd.s32 %v1312, %v1310
    %v1314 = vand.u32 %v1029, 65535
    %v1315 = vshra.s32 %v1029, 16
    %v1316 = vcvt.s32.f32 %v1314
    %v1317 = vcvt.s32.f32 %v1315
    %1318 = vmin.xlane.f32.xlu0 %v1317
    %v1319 = vpop.xlane.xlu0 %1318
    %vm1320 = vcmp.eq.f32.partialorder %v1317, %v1319
    %v1321 = vsel %vm1320, %v1316, inf
    %1322 = vmin.xlane.f32.xlu0 %v1321
    %v1323 = vpop.xlane.xlu0 %1322
    %v1324 = vcvt.f32.s32 %v1323
    %v1325 = vcvt.f32.s32 %v1319
    %v1326 = vshll.u32 %v1325, 16
    %v1327 = vadd.s32 %v1326, %v1324
    %v1328 = vand.u32 %v1030, 65535
    %v1329 = vshra.s32 %v1030, 16
    %v1330 = vcvt.s32.f32 %v1328
    %v1331 = vcvt.s32.f32 %v1329
    %1332 = vmin.xlane.f32.xlu0 %v1331
    %v1333 = vpop.xlane.xlu0 %1332
    %vm1334 = vcmp.eq.f32.partialorder %v1331, %v1333
    %v1335 = vsel %vm1334, %v1330, inf
    %1336 = vmin.xlane.f32.xlu0 %v1335
    %v1337 = vpop.xlane.xlu0 %1336
    %v1338 = vcvt.f32.s32 %v1337
    %v1339 = vcvt.f32.s32 %v1333
    %v1340 = vshll.u32 %v1339, 16
    %v1341 = vadd.s32 %v1340, %v1338
    %v1342 = vand.u32 %v1031, 65535
    %v1343 = vshra.s32 %v1031, 16
    %v1344 = vcvt.s32.f32 %v1342
    %v1345 = vcvt.s32.f32 %v1343
    %1346 = vmin.xlane.f32.xlu0 %v1345
    %v1347 = vpop.xlane.xlu0 %1346
    %vm1348 = vcmp.eq.f32.partialorder %v1345, %v1347
    %v1349 = vsel %vm1348, %v1344, inf
    %1350 = vmin.xlane.f32.xlu0 %v1349
    %v1351 = vpop.xlane.xlu0 %1350
    %v1352 = vcvt.f32.s32 %v1351
    %v1353 = vcvt.f32.s32 %v1347
    %v1354 = vshll.u32 %v1353, 16
    %v1355 = vadd.s32 %v1354, %v1352
    %v1356 = vand.u32 %v1032, 65535
    %v1357 = vshra.s32 %v1032, 16
    %v1358 = vcvt.s32.f32 %v1356
    %v1359 = vcvt.s32.f32 %v1357
    %1360 = vmin.xlane.f32.xlu0 %v1359
    %v1361 = vpop.xlane.xlu0 %1360
    %vm1362 = vcmp.eq.f32.partialorder %v1359, %v1361
    %v1363 = vsel %vm1362, %v1358, inf
    %1364 = vmin.xlane.f32.xlu0 %v1363
    %v1365 = vpop.xlane.xlu0 %1364
    %v1366 = vcvt.f32.s32 %v1365
    %v1367 = vcvt.f32.s32 %v1361
    %v1368 = vshll.u32 %v1367, 16
    %v1369 = vadd.s32 %v1368, %v1366
    %v1370 = vand.u32 %v1033, 65535
    %v1371 = vshra.s32 %v1033, 16
    %v1372 = vcvt.s32.f32 %v1370
    %v1373 = vcvt.s32.f32 %v1371
    %1374 = vmin.xlane.f32.xlu0 %v1373
    %v1375 = vpop.xlane.xlu0 %1374
    %vm1376 = vcmp.eq.f32.partialorder %v1373, %v1375
    %v1377 = vsel %vm1376, %v1372, inf
    %1378 = vmin.xlane.f32.xlu0 %v1377
    %v1379 = vpop.xlane.xlu0 %1378
    %v1380 = vcvt.f32.s32 %v1379
    %v1381 = vcvt.f32.s32 %v1375
    %v1382 = vshll.u32 %v1381, 16
    %v1383 = vadd.s32 %v1382, %v1380
    %v1384 = vand.u32 %v1034, 65535
    %v1385 = vshra.s32 %v1034, 16
    %v1386 = vcvt.s32.f32 %v1384
    %v1387 = vcvt.s32.f32 %v1385
    %1388 = vmin.xlane.f32.xlu0 %v1387
    %v1389 = vpop.xlane.xlu0 %1388
    %vm1390 = vcmp.eq.f32.partialorder %v1387, %v1389
    %v1391 = vsel %vm1390, %v1386, inf
    %1392 = vmin.xlane.f32.xlu0 %v1391
    %v1393 = vpop.xlane.xlu0 %1392
    %v1394 = vcvt.f32.s32 %v1393
    %v1395 = vcvt.f32.s32 %v1389
    %v1396 = vshll.u32 %v1395, 16
    %v1397 = vadd.s32 %v1396, %v1394
    %v1398 = vand.u32 %v1035, 65535
    %v1399 = vshra.s32 %v1035, 16
    %v1400 = vcvt.s32.f32 %v1398
    %v1401 = vcvt.s32.f32 %v1399
    %1402 = vmin.xlane.f32.xlu0 %v1401
    %v1403 = vpop.xlane.xlu0 %1402
    %vm1404 = vcmp.eq.f32.partialorder %v1401, %v1403
    %v1405 = vsel %vm1404, %v1400, inf
    %1406 = vmin.xlane.f32.xlu0 %v1405
    %v1407 = vpop.xlane.xlu0 %1406
    %v1408 = vcvt.f32.s32 %v1407
    %v1409 = vcvt.f32.s32 %v1403
    %v1410 = vshll.u32 %v1409, 16
    %v1411 = vadd.s32 %v1410, %v1408
    %v1412 = vand.u32 %v1036, 65535
    %v1413 = vshra.s32 %v1036, 16
    %v1414 = vcvt.s32.f32 %v1412
    %v1415 = vcvt.s32.f32 %v1413
    %1416 = vmin.xlane.f32.xlu0 %v1415
    %v1417 = vpop.xlane.xlu0 %1416
    %vm1418 = vcmp.eq.f32.partialorder %v1415, %v1417
    %v1419 = vsel %vm1418, %v1414, inf
    %1420 = vmin.xlane.f32.xlu0 %v1419
    %v1421 = vpop.xlane.xlu0 %1420
    %v1422 = vcvt.f32.s32 %v1421
    %v1423 = vcvt.f32.s32 %v1417
    %v1424 = vshll.u32 %v1423, 16
    %v1425 = vadd.s32 %v1424, %v1422
    %v1426 = vand.u32 %v1037, 65535
    %v1427 = vshra.s32 %v1037, 16
    %v1428 = vcvt.s32.f32 %v1426
    %v1429 = vcvt.s32.f32 %v1427
    %1430 = vmin.xlane.f32.xlu0 %v1429
    %v1431 = vpop.xlane.xlu0 %1430
    %vm1432 = vcmp.eq.f32.partialorder %v1429, %v1431
    %v1433 = vsel %vm1432, %v1428, inf
    %1434 = vmin.xlane.f32.xlu0 %v1433
    %v1435 = vpop.xlane.xlu0 %1434
    %v1436 = vcvt.f32.s32 %v1435
    %v1437 = vcvt.f32.s32 %v1431
    %v1438 = vshll.u32 %v1437, 16
    %v1439 = vadd.s32 %v1438, %v1436
    %v1440 = vand.u32 %v1038, 65535
    %v1441 = vshra.s32 %v1038, 16
    %v1442 = vcvt.s32.f32 %v1440
    %v1443 = vcvt.s32.f32 %v1441
    %1444 = vmin.xlane.f32.xlu0 %v1443
    %v1445 = vpop.xlane.xlu0 %1444
    %vm1446 = vcmp.eq.f32.partialorder %v1443, %v1445
    %v1447 = vsel %vm1446, %v1442, inf
    %1448 = vmin.xlane.f32.xlu0 %v1447
    %v1449 = vpop.xlane.xlu0 %1448
    %v1450 = vcvt.f32.s32 %v1449
    %v1451 = vcvt.f32.s32 %v1445
    %v1452 = vshll.u32 %v1451, 16
    %v1453 = vadd.s32 %v1452, %v1450
    %v1454 = vand.u32 %v1039, 65535
    %v1455 = vshra.s32 %v1039, 16
    %v1456 = vcvt.s32.f32 %v1454
    %v1457 = vcvt.s32.f32 %v1455
    %1458 = vmin.xlane.f32.xlu0 %v1457
    %v1459 = vpop.xlane.xlu0 %1458
    %vm1460 = vcmp.eq.f32.partialorder %v1457, %v1459
    %v1461 = vsel %vm1460, %v1456, inf
    %1462 = vmin.xlane.f32.xlu0 %v1461
    %v1463 = vpop.xlane.xlu0 %1462
    %v1464 = vcvt.f32.s32 %v1463
    %v1465 = vcvt.f32.s32 %v1459
    %v1466 = vshll.u32 %v1465, 16
    %v1467 = vadd.s32 %v1466, %v1464
    %v1468 = vand.u32 %v1040, 65535
    %v1469 = vshra.s32 %v1040, 16
    %v1470 = vcvt.s32.f32 %v1468
    %v1471 = vcvt.s32.f32 %v1469
    %1472 = vmin.xlane.f32.xlu0 %v1471
    %v1473 = vpop.xlane.xlu0 %1472
    %vm1474 = vcmp.eq.f32.partialorder %v1471, %v1473
    %v1475 = vsel %vm1474, %v1470, inf
    %1476 = vmin.xlane.f32.xlu0 %v1475
    %v1477 = vpop.xlane.xlu0 %1476
    %v1478 = vcvt.f32.s32 %v1477
    %v1479 = vcvt.f32.s32 %v1473
    %v1480 = vshll.u32 %v1479, 16
    %v1481 = vadd.s32 %v1480, %v1478
    %v1482 = vand.u32 %v1041, 65535
    %v1483 = vshra.s32 %v1041, 16
    %v1484 = vcvt.s32.f32 %v1482
    %v1485 = vcvt.s32.f32 %v1483
    %1486 = vmin.xlane.f32.xlu0 %v1485
    %v1487 = vpop.xlane.xlu0 %1486
    %vm1488 = vcmp.eq.f32.partialorder %v1485, %v1487
    %v1489 = vsel %vm1488, %v1484, inf
    %1490 = vmin.xlane.f32.xlu0 %v1489
    %v1491 = vpop.xlane.xlu0 %1490
    %v1492 = vcvt.f32.s32 %v1491
    %v1493 = vcvt.f32.s32 %v1487
    %v1494 = vshll.u32 %v1493, 16
    %v1495 = vadd.s32 %v1494, %v1492
    %v1496 = vand.u32 %v1042, 65535
    %v1497 = vshra.s32 %v1042, 16
    %v1498 = vcvt.s32.f32 %v1496
    %v1499 = vcvt.s32.f32 %v1497
    %1500 = vmin.xlane.f32.xlu0 %v1499
    %v1501 = vpop.xlane.xlu0 %1500
    %vm1502 = vcmp.eq.f32.partialorder %v1499, %v1501
    %v1503 = vsel %vm1502, %v1498, inf
    %1504 = vmin.xlane.f32.xlu0 %v1503
    %v1505 = vpop.xlane.xlu0 %1504
    %v1506 = vcvt.f32.s32 %v1505
    %v1507 = vcvt.f32.s32 %v1501
    %v1508 = vshll.u32 %v1507, 16
    %v1509 = vadd.s32 %v1508, %v1506
    %v1510 = vand.u32 %v1043, 65535
    %v1511 = vshra.s32 %v1043, 16
    %v1512 = vcvt.s32.f32 %v1510
    %v1513 = vcvt.s32.f32 %v1511
    %1514 = vmin.xlane.f32.xlu0 %v1513
    %v1515 = vpop.xlane.xlu0 %1514
    %vm1516 = vcmp.eq.f32.partialorder %v1513, %v1515
    %v1517 = vsel %vm1516, %v1512, inf
    %1518 = vmin.xlane.f32.xlu0 %v1517
    %v1519 = vpop.xlane.xlu0 %1518
    %v1520 = vcvt.f32.s32 %v1519
    %v1521 = vcvt.f32.s32 %v1515
    %v1522 = vshll.u32 %v1521, 16
    %v1523 = vadd.s32 %v1522, %v1520
    %v1524 = vand.u32 %v1044, 65535
    %v1525 = vshra.s32 %v1044, 16
    %v1526 = vcvt.s32.f32 %v1524
    %v1527 = vcvt.s32.f32 %v1525
    %1528 = vmin.xlane.f32.xlu0 %v1527
    %v1529 = vpop.xlane.xlu0 %1528
    %vm1530 = vcmp.eq.f32.partialorder %v1527, %v1529
    %v1531 = vsel %vm1530, %v1526, inf
    %1532 = vmin.xlane.f32.xlu0 %v1531
    %v1533 = vpop.xlane.xlu0 %1532
    %v1534 = vcvt.f32.s32 %v1533
    %v1535 = vcvt.f32.s32 %v1529
    %v1536 = vshll.u32 %v1535, 16
    %v1537 = vadd.s32 %v1536, %v1534
    %v1538 = vand.u32 %v1045, 65535
    %v1539 = vshra.s32 %v1045, 16
    %v1540 = vcvt.s32.f32 %v1538
    %v1541 = vcvt.s32.f32 %v1539
    %1542 = vmin.xlane.f32.xlu0 %v1541
    %v1543 = vpop.xlane.xlu0 %1542
    %vm1544 = vcmp.eq.f32.partialorder %v1541, %v1543
    %v1545 = vsel %vm1544, %v1540, inf
    %1546 = vmin.xlane.f32.xlu0 %v1545
    %v1547 = vpop.xlane.xlu0 %1546
    %v1548 = vcvt.f32.s32 %v1547
    %v1549 = vcvt.f32.s32 %v1543
    %v1550 = vshll.u32 %v1549, 16
    %v1551 = vadd.s32 %v1550, %v1548
    %v1552 = vand.u32 %v1046, 65535
    %v1553 = vshra.s32 %v1046, 16
    %v1554 = vcvt.s32.f32 %v1552
    %v1555 = vcvt.s32.f32 %v1553
    %1556 = vmin.xlane.f32.xlu0 %v1555
    %v1557 = vpop.xlane.xlu0 %1556
    %vm1558 = vcmp.eq.f32.partialorder %v1555, %v1557
    %v1559 = vsel %vm1558, %v1554, inf
    %1560 = vmin.xlane.f32.xlu0 %v1559
    %v1561 = vpop.xlane.xlu0 %1560
    %v1562 = vcvt.f32.s32 %v1561
    %v1563 = vcvt.f32.s32 %v1557
    %v1564 = vshll.u32 %v1563, 16
    %v1565 = vadd.s32 %v1564, %v1562
    %v1566 = vand.u32 %v1047, 65535
    %v1567 = vshra.s32 %v1047, 16
    %v1568 = vcvt.s32.f32 %v1566
    %v1569 = vcvt.s32.f32 %v1567
    %1570 = vmin.xlane.f32.xlu0 %v1569
    %v1571 = vpop.xlane.xlu0 %1570
    %vm1572 = vcmp.eq.f32.partialorder %v1569, %v1571
    %v1573 = vsel %vm1572, %v1568, inf
    %1574 = vmin.xlane.f32.xlu0 %v1573
    %v1575 = vpop.xlane.xlu0 %1574
    %v1576 = vcvt.f32.s32 %v1575
    %v1577 = vcvt.f32.s32 %v1571
    %v1578 = vshll.u32 %v1577, 16
    %v1579 = vadd.s32 %v1578, %v1576
    %v1580 = vand.u32 %v1048, 65535
    %v1581 = vshra.s32 %v1048, 16
    %v1582 = vcvt.s32.f32 %v1580
    %v1583 = vcvt.s32.f32 %v1581
    %1584 = vmin.xlane.f32.xlu0 %v1583
    %v1585 = vpop.xlane.xlu0 %1584
    %vm1586 = vcmp.eq.f32.partialorder %v1583, %v1585
    %v1587 = vsel %vm1586, %v1582, inf
    %1588 = vmin.xlane.f32.xlu0 %v1587
    %v1589 = vpop.xlane.xlu0 %1588
    %v1590 = vcvt.f32.s32 %v1589
    %v1591 = vcvt.f32.s32 %v1585
    %v1592 = vshll.u32 %v1591, 16
    %v1593 = vadd.s32 %v1592, %v1590
    %v1594 = vand.u32 %v1049, 65535
    %v1595 = vshra.s32 %v1049, 16
    %v1596 = vcvt.s32.f32 %v1594
    %v1597 = vcvt.s32.f32 %v1595
    %1598 = vmin.xlane.f32.xlu0 %v1597
    %v1599 = vpop.xlane.xlu0 %1598
    %vm1600 = vcmp.eq.f32.partialorder %v1597, %v1599
    %v1601 = vsel %vm1600, %v1596, inf
    %1602 = vmin.xlane.f32.xlu0 %v1601
    %v1603 = vpop.xlane.xlu0 %1602
    %v1604 = vcvt.f32.s32 %v1603
    %v1605 = vcvt.f32.s32 %v1599
    %v1606 = vshll.u32 %v1605, 16
    %v1607 = vadd.s32 %v1606, %v1604
    %v1608 = vand.u32 %v1050, 65535
    %v1609 = vshra.s32 %v1050, 16
    %v1610 = vcvt.s32.f32 %v1608
    %v1611 = vcvt.s32.f32 %v1609
    %1612 = vmin.xlane.f32.xlu0 %v1611
    %v1613 = vpop.xlane.xlu0 %1612
    %vm1614 = vcmp.eq.f32.partialorder %v1611, %v1613
    %v1615 = vsel %vm1614, %v1610, inf
    %1616 = vmin.xlane.f32.xlu0 %v1615
    %v1617 = vpop.xlane.xlu0 %1616
    %v1618 = vcvt.f32.s32 %v1617
    %v1619 = vcvt.f32.s32 %v1613
    %v1620 = vshll.u32 %v1619, 16
    %v1621 = vadd.s32 %v1620, %v1618
    %v1622 = vand.u32 %v1051, 65535
    %v1623 = vshra.s32 %v1051, 16
    %v1624 = vcvt.s32.f32 %v1622
    %v1625 = vcvt.s32.f32 %v1623
    %1626 = vmin.xlane.f32.xlu0 %v1625
    %v1627 = vpop.xlane.xlu0 %1626
    %vm1628 = vcmp.eq.f32.partialorder %v1625, %v1627
    %v1629 = vsel %vm1628, %v1624, inf
    %1630 = vmin.xlane.f32.xlu0 %v1629
    %v1631 = vpop.xlane.xlu0 %1630
    %v1632 = vcvt.f32.s32 %v1631
    %v1633 = vcvt.f32.s32 %v1627
    %v1634 = vshll.u32 %v1633, 16
    %v1635 = vadd.s32 %v1634, %v1632
    %v1636 = vand.u32 %v1052, 65535
    %v1637 = vshra.s32 %v1052, 16
    %v1638 = vcvt.s32.f32 %v1636
    %v1639 = vcvt.s32.f32 %v1637
    %1640 = vmin.xlane.f32.xlu0 %v1639
    %v1641 = vpop.xlane.xlu0 %1640
    %vm1642 = vcmp.eq.f32.partialorder %v1639, %v1641
    %v1643 = vsel %vm1642, %v1638, inf
    %1644 = vmin.xlane.f32.xlu0 %v1643
    %v1645 = vpop.xlane.xlu0 %1644
    %v1646 = vcvt.f32.s32 %v1645
    %v1647 = vcvt.f32.s32 %v1641
    %v1648 = vshll.u32 %v1647, 16
    %v1649 = vadd.s32 %v1648, %v1646
    %v1650 = vand.u32 %v1053, 65535
    %v1651 = vshra.s32 %v1053, 16
    %v1652 = vcvt.s32.f32 %v1650
    %v1653 = vcvt.s32.f32 %v1651
    %1654 = vmin.xlane.f32.xlu0 %v1653
    %v1655 = vpop.xlane.xlu0 %1654
    %vm1656 = vcmp.eq.f32.partialorder %v1653, %v1655
    %v1657 = vsel %vm1656, %v1652, inf
    %1658 = vmin.xlane.f32.xlu0 %v1657
    %v1659 = vpop.xlane.xlu0 %1658
    %v1660 = vcvt.f32.s32 %v1659
    %v1661 = vcvt.f32.s32 %v1655
    %v1662 = vshll.u32 %v1661, 16
    %v1663 = vadd.s32 %v1662, %v1660
    %v1664 = vand.u32 %v1054, 65535
    %v1665 = vshra.s32 %v1054, 16
    %v1666 = vcvt.s32.f32 %v1664
    %v1667 = vcvt.s32.f32 %v1665
    %1668 = vmin.xlane.f32.xlu0 %v1667
    %v1669 = vpop.xlane.xlu0 %1668
    %vm1670 = vcmp.eq.f32.partialorder %v1667, %v1669
    %v1671 = vsel %vm1670, %v1666, inf
    %1672 = vmin.xlane.f32.xlu0 %v1671
    %v1673 = vpop.xlane.xlu0 %1672
    %v1674 = vcvt.f32.s32 %v1673
    %v1675 = vcvt.f32.s32 %v1669
    %v1676 = vshll.u32 %v1675, 16
    %v1677 = vadd.s32 %v1676, %v1674
    %v1678 = vand.u32 %v1055, 65535
    %v1679 = vshra.s32 %v1055, 16
    %v1680 = vcvt.s32.f32 %v1678
    %v1681 = vcvt.s32.f32 %v1679
    %1682 = vmin.xlane.f32.xlu0 %v1681
    %v1683 = vpop.xlane.xlu0 %1682
    %vm1684 = vcmp.eq.f32.partialorder %v1681, %v1683
    %v1685 = vsel %vm1684, %v1680, inf
    %1686 = vmin.xlane.f32.xlu0 %v1685
    %v1687 = vpop.xlane.xlu0 %1686
    %v1688 = vcvt.f32.s32 %v1687
    %v1689 = vcvt.f32.s32 %v1683
    %v1690 = vshll.u32 %v1689, 16
    %v1691 = vadd.s32 %v1690, %v1688
    %v1692 = vand.u32 %v1056, 65535
    %v1693 = vshra.s32 %v1056, 16
    %v1694 = vcvt.s32.f32 %v1692
    %v1695 = vcvt.s32.f32 %v1693
    %1696 = vmin.xlane.f32.xlu0 %v1695
    %v1697 = vpop.xlane.xlu0 %1696
    %vm1698 = vcmp.eq.f32.partialorder %v1695, %v1697
    %v1699 = vsel %vm1698, %v1694, inf
    %1700 = vmin.xlane.f32.xlu0 %v1699
    %v1701 = vpop.xlane.xlu0 %1700
    %v1702 = vcvt.f32.s32 %v1701
    %v1703 = vcvt.f32.s32 %v1697
    %v1704 = vshll.u32 %v1703, 16
    %v1705 = vadd.s32 %v1704, %v1702
    %v1706 = vand.u32 %v1057, 65535
    %v1707 = vshra.s32 %v1057, 16
    %v1708 = vcvt.s32.f32 %v1706
    %v1709 = vcvt.s32.f32 %v1707
    %1710 = vmin.xlane.f32.xlu0 %v1709
    %v1711 = vpop.xlane.xlu0 %1710
    %vm1712 = vcmp.eq.f32.partialorder %v1709, %v1711
    %v1713 = vsel %vm1712, %v1708, inf
    %1714 = vmin.xlane.f32.xlu0 %v1713
    %v1715 = vpop.xlane.xlu0 %1714
    %v1716 = vcvt.f32.s32 %v1715
    %v1717 = vcvt.f32.s32 %v1711
    %v1718 = vshll.u32 %v1717, 16
    %v1719 = vadd.s32 %v1718, %v1716
    %v1720 = vand.u32 %v1058, 65535
    %v1721 = vshra.s32 %v1058, 16
    %v1722 = vcvt.s32.f32 %v1720
    %v1723 = vcvt.s32.f32 %v1721
    %1724 = vmin.xlane.f32.xlu0 %v1723
    %v1725 = vpop.xlane.xlu0 %1724
    %vm1726 = vcmp.eq.f32.partialorder %v1723, %v1725
    %v1727 = vsel %vm1726, %v1722, inf
    %1728 = vmin.xlane.f32.xlu0 %v1727
    %v1729 = vpop.xlane.xlu0 %1728
    %v1730 = vcvt.f32.s32 %v1729
    %v1731 = vcvt.f32.s32 %v1725
    %v1732 = vshll.u32 %v1731, 16
    %v1733 = vadd.s32 %v1732, %v1730
    %v1734 = vand.u32 %v1059, 65535
    %v1735 = vshra.s32 %v1059, 16
    %v1736 = vcvt.s32.f32 %v1734
    %v1737 = vcvt.s32.f32 %v1735
    %1738 = vmin.xlane.f32.xlu0 %v1737
    %v1739 = vpop.xlane.xlu0 %1738
    %vm1740 = vcmp.eq.f32.partialorder %v1737, %v1739
    %v1741 = vsel %vm1740, %v1736, inf
    %1742 = vmin.xlane.f32.xlu0 %v1741
    %v1743 = vpop.xlane.xlu0 %1742
    %v1744 = vcvt.f32.s32 %v1743
    %v1745 = vcvt.f32.s32 %v1739
    %v1746 = vshll.u32 %v1745, 16
    %v1747 = vadd.s32 %v1746, %v1744
    %v1748 = vand.u32 %v1060, 65535
    %v1749 = vshra.s32 %v1060, 16
    %v1750 = vcvt.s32.f32 %v1748
    %v1751 = vcvt.s32.f32 %v1749
    %1752 = vmin.xlane.f32.xlu0 %v1751
    %v1753 = vpop.xlane.xlu0 %1752
    %vm1754 = vcmp.eq.f32.partialorder %v1751, %v1753
    %v1755 = vsel %vm1754, %v1750, inf
    %1756 = vmin.xlane.f32.xlu0 %v1755
    %v1757 = vpop.xlane.xlu0 %1756
    %v1758 = vcvt.f32.s32 %v1757
    %v1759 = vcvt.f32.s32 %v1753
    %v1760 = vshll.u32 %v1759, 16
    %v1761 = vadd.s32 %v1760, %v1758
    %v1762 = vand.u32 %v1061, 65535
    %v1763 = vshra.s32 %v1061, 16
    %v1764 = vcvt.s32.f32 %v1762
    %v1765 = vcvt.s32.f32 %v1763
    %1766 = vmin.xlane.f32.xlu0 %v1765
    %v1767 = vpop.xlane.xlu0 %1766
    %vm1768 = vcmp.eq.f32.partialorder %v1765, %v1767
    %v1769 = vsel %vm1768, %v1764, inf
    %1770 = vmin.xlane.f32.xlu0 %v1769
    %v1771 = vpop.xlane.xlu0 %1770
    %v1772 = vcvt.f32.s32 %v1771
    %v1773 = vcvt.f32.s32 %v1767
    %v1774 = vshll.u32 %v1773, 16
    %v1775 = vadd.s32 %v1774, %v1772
    %v1776 = vand.u32 %v1062, 65535
    %v1777 = vshra.s32 %v1062, 16
    %v1778 = vcvt.s32.f32 %v1776
    %v1779 = vcvt.s32.f32 %v1777
    %1780 = vmin.xlane.f32.xlu0 %v1779
    %v1781 = vpop.xlane.xlu0 %1780
    %vm1782 = vcmp.eq.f32.partialorder %v1779, %v1781
    %v1783 = vsel %vm1782, %v1778, inf
    %1784 = vmin.xlane.f32.xlu0 %v1783
    %v1785 = vpop.xlane.xlu0 %1784
    %v1786 = vcvt.f32.s32 %v1785
    %v1787 = vcvt.f32.s32 %v1781
    %v1788 = vshll.u32 %v1787, 16
    %v1789 = vadd.s32 %v1788, %v1786
    %v1790 = vand.u32 %v1063, 65535
    %v1791 = vshra.s32 %v1063, 16
    %v1792 = vcvt.s32.f32 %v1790
    %v1793 = vcvt.s32.f32 %v1791
    %1794 = vmin.xlane.f32.xlu0 %v1793
    %v1795 = vpop.xlane.xlu0 %1794
    %vm1796 = vcmp.eq.f32.partialorder %v1793, %v1795
    %v1797 = vsel %vm1796, %v1792, inf
    %1798 = vmin.xlane.f32.xlu0 %v1797
    %v1799 = vpop.xlane.xlu0 %1798
    %v1800 = vcvt.f32.s32 %v1799
    %v1801 = vcvt.f32.s32 %v1795
    %v1802 = vshll.u32 %v1801, 16
    %v1803 = vadd.s32 %v1802, %v1800
    %v1804 = vand.u32 %v1064, 65535
    %v1805 = vshra.s32 %v1064, 16
    %v1806 = vcvt.s32.f32 %v1804
    %v1807 = vcvt.s32.f32 %v1805
    %1808 = vmin.xlane.f32.xlu0 %v1807
    %v1809 = vpop.xlane.xlu0 %1808
    %vm1810 = vcmp.eq.f32.partialorder %v1807, %v1809
    %v1811 = vsel %vm1810, %v1806, inf
    %1812 = vmin.xlane.f32.xlu0 %v1811
    %v1813 = vpop.xlane.xlu0 %1812
    %v1814 = vcvt.f32.s32 %v1813
    %v1815 = vcvt.f32.s32 %v1809
    %v1816 = vshll.u32 %v1815, 16
    %v1817 = vadd.s32 %v1816, %v1814
    %v1818 = vand.u32 %v1065, 65535
    %v1819 = vshra.s32 %v1065, 16
    %v1820 = vcvt.s32.f32 %v1818
    %v1821 = vcvt.s32.f32 %v1819
    %1822 = vmin.xlane.f32.xlu0 %v1821
    %v1823 = vpop.xlane.xlu0 %1822
    %vm1824 = vcmp.eq.f32.partialorder %v1821, %v1823
    %v1825 = vsel %vm1824, %v1820, inf
    %1826 = vmin.xlane.f32.xlu0 %v1825
    %v1827 = vpop.xlane.xlu0 %1826
    %v1828 = vcvt.f32.s32 %v1827
    %v1829 = vcvt.f32.s32 %v1823
    %v1830 = vshll.u32 %v1829, 16
    %v1831 = vadd.s32 %v1830, %v1828
    %v1832 = vand.u32 %v1066, 65535
    %v1833 = vshra.s32 %v1066, 16
    %v1834 = vcvt.s32.f32 %v1832
    %v1835 = vcvt.s32.f32 %v1833
    %1836 = vmin.xlane.f32.xlu0 %v1835
    %v1837 = vpop.xlane.xlu0 %1836
    %vm1838 = vcmp.eq.f32.partialorder %v1835, %v1837
    %v1839 = vsel %vm1838, %v1834, inf
    %1840 = vmin.xlane.f32.xlu0 %v1839
    %v1841 = vpop.xlane.xlu0 %1840
    %v1842 = vcvt.f32.s32 %v1841
    %v1843 = vcvt.f32.s32 %v1837
    %v1844 = vshll.u32 %v1843, 16
    %v1845 = vadd.s32 %v1844, %v1842
    %v1846 = vand.u32 %v1067, 65535
    %v1847 = vshra.s32 %v1067, 16
    %v1848 = vcvt.s32.f32 %v1846
    %v1849 = vcvt.s32.f32 %v1847
    %1850 = vmin.xlane.f32.xlu0 %v1849
    %v1851 = vpop.xlane.xlu0 %1850
    %vm1852 = vcmp.eq.f32.partialorder %v1849, %v1851
    %v1853 = vsel %vm1852, %v1848, inf
    %1854 = vmin.xlane.f32.xlu0 %v1853
    %v1855 = vpop.xlane.xlu0 %1854
    %v1856 = vcvt.f32.s32 %v1855
    %v1857 = vcvt.f32.s32 %v1851
    %v1858 = vshll.u32 %v1857, 16
    %v1859 = vadd.s32 %v1858, %v1856
    %v1860 = vand.u32 %v1068, 65535
    %v1861 = vshra.s32 %v1068, 16
    %v1862 = vcvt.s32.f32 %v1860
    %v1863 = vcvt.s32.f32 %v1861
    %1864 = vmin.xlane.f32.xlu0 %v1863
    %v1865 = vpop.xlane.xlu0 %1864
    %vm1866 = vcmp.eq.f32.partialorder %v1863, %v1865
    %v1867 = vsel %vm1866, %v1862, inf
    %1868 = vmin.xlane.f32.xlu0 %v1867
    %v1869 = vpop.xlane.xlu0 %1868
    %v1870 = vcvt.f32.s32 %v1869
    %v1871 = vcvt.f32.s32 %v1865
    %v1872 = vshll.u32 %v1871, 16
    %v1873 = vadd.s32 %v1872, %v1870
    %v1874 = vand.u32 %v1069, 65535
    %v1875 = vshra.s32 %v1069, 16
    %v1876 = vcvt.s32.f32 %v1874
    %v1877 = vcvt.s32.f32 %v1875
    %1878 = vmin.xlane.f32.xlu0 %v1877
    %v1879 = vpop.xlane.xlu0 %1878
    %vm1880 = vcmp.eq.f32.partialorder %v1877, %v1879
    %v1881 = vsel %vm1880, %v1876, inf
    %1882 = vmin.xlane.f32.xlu0 %v1881
    %v1883 = vpop.xlane.xlu0 %1882
    %v1884 = vcvt.f32.s32 %v1883
    %v1885 = vcvt.f32.s32 %v1879
    %v1886 = vshll.u32 %v1885, 16
    %v1887 = vadd.s32 %v1886, %v1884
    %v1888 = vand.u32 %v1070, 65535
    %v1889 = vshra.s32 %v1070, 16
    %v1890 = vcvt.s32.f32 %v1888
    %v1891 = vcvt.s32.f32 %v1889
    %1892 = vmin.xlane.f32.xlu0 %v1891
    %v1893 = vpop.xlane.xlu0 %1892
    %vm1894 = vcmp.eq.f32.partialorder %v1891, %v1893
    %v1895 = vsel %vm1894, %v1890, inf
    %1896 = vmin.xlane.f32.xlu0 %v1895
    %v1897 = vpop.xlane.xlu0 %1896
    %v1898 = vcvt.f32.s32 %v1897
    %v1899 = vcvt.f32.s32 %v1893
    %v1900 = vshll.u32 %v1899, 16
    %v1901 = vadd.s32 %v1900, %v1898
    %v1902 = vand.u32 %v1071, 65535
    %v1903 = vshra.s32 %v1071, 16
    %v1904 = vcvt.s32.f32 %v1902
    %v1905 = vcvt.s32.f32 %v1903
    %1906 = vmin.xlane.f32.xlu0 %v1905
    %v1907 = vpop.xlane.xlu0 %1906
    %vm1908 = vcmp.eq.f32.partialorder %v1905, %v1907
    %v1909 = vsel %vm1908, %v1904, inf
    %1910 = vmin.xlane.f32.xlu0 %v1909
    %v1911 = vpop.xlane.xlu0 %1910
    %v1912 = vcvt.f32.s32 %v1911
    %v1913 = vcvt.f32.s32 %v1907
    %v1914 = vshll.u32 %v1913, 16
    %v1915 = vadd.s32 %v1914, %v1912
    %v1916 = vand.u32 %v1072, 65535
    %v1917 = vshra.s32 %v1072, 16
    %v1918 = vcvt.s32.f32 %v1916
    %v1919 = vcvt.s32.f32 %v1917
    %1920 = vmin.xlane.f32.xlu0 %v1919
    %v1921 = vpop.xlane.xlu0 %1920
    %vm1922 = vcmp.eq.f32.partialorder %v1919, %v1921
    %v1923 = vsel %vm1922, %v1918, inf
    %1924 = vmin.xlane.f32.xlu0 %v1923
    %v1925 = vpop.xlane.xlu0 %1924
    %v1926 = vcvt.f32.s32 %v1925
    %v1927 = vcvt.f32.s32 %v1921
    %v1928 = vshll.u32 %v1927, 16
    %v1929 = vadd.s32 %v1928, %v1926
    %v1930 = vand.u32 %v1073, 65535
    %v1931 = vshra.s32 %v1073, 16
    %v1932 = vcvt.s32.f32 %v1930
    %v1933 = vcvt.s32.f32 %v1931
    %1934 = vmin.xlane.f32.xlu0 %v1933
    %v1935 = vpop.xlane.xlu0 %1934
    %vm1936 = vcmp.eq.f32.partialorder %v1933, %v1935
    %v1937 = vsel %vm1936, %v1932, inf
    %1938 = vmin.xlane.f32.xlu0 %v1937
    %v1939 = vpop.xlane.xlu0 %1938
    %v1940 = vcvt.f32.s32 %v1939
    %v1941 = vcvt.f32.s32 %v1935
    %v1942 = vshll.u32 %v1941, 16
    %v1943 = vadd.s32 %v1942, %v1940
    %v1944 = vand.u32 %v1074, 65535
    %v1945 = vshra.s32 %v1074, 16
    %v1946 = vcvt.s32.f32 %v1944
    %v1947 = vcvt.s32.f32 %v1945
    %1948 = vmin.xlane.f32.xlu0 %v1947
    %v1949 = vpop.xlane.xlu0 %1948
    %vm1950 = vcmp.eq.f32.partialorder %v1947, %v1949
    %v1951 = vsel %vm1950, %v1946, inf
    %1952 = vmin.xlane.f32.xlu0 %v1951
    %v1953 = vpop.xlane.xlu0 %1952
    %v1954 = vcvt.f32.s32 %v1953
    %v1955 = vcvt.f32.s32 %v1949
    %v1956 = vshll.u32 %v1955, 16
    %v1957 = vadd.s32 %v1956, %v1954
    %v1958 = vand.u32 %v1075, 65535
    %v1959 = vshra.s32 %v1075, 16
    %v1960 = vcvt.s32.f32 %v1958
    %v1961 = vcvt.s32.f32 %v1959
    %1962 = vmin.xlane.f32.xlu0 %v1961
    %v1963 = vpop.xlane.xlu0 %1962
    %vm1964 = vcmp.eq.f32.partialorder %v1961, %v1963
    %v1965 = vsel %vm1964, %v1960, inf
    %1966 = vmin.xlane.f32.xlu0 %v1965
    %v1967 = vpop.xlane.xlu0 %1966
    %v1968 = vcvt.f32.s32 %v1967
    %v1969 = vcvt.f32.s32 %v1963
    %v1970 = vshll.u32 %v1969, 16
    %v1971 = vadd.s32 %v1970, %v1968
    %vm1972 = vcmp.eq.s32.totalorder %v947, %v1089
    %vm1973 = vcmp.eq.s32.totalorder %v947, %v1103
    %vm1974 = vcmp.eq.s32.totalorder %v947, %v1117
    %vm1975 = vcmp.eq.s32.totalorder %v947, %v1131
    %vm1976 = vcmp.eq.s32.totalorder %v947, %v1145
    %vm1977 = vcmp.eq.s32.totalorder %v947, %v1159
    %vm1978 = vcmp.eq.s32.totalorder %v947, %v1173
    %vm1979 = vcmp.eq.s32.totalorder %v947, %v1187
    %vm1980 = vcmp.eq.s32.totalorder %v947, %v1201
    %vm1981 = vcmp.eq.s32.totalorder %v947, %v1215
    %vm1982 = vcmp.eq.s32.totalorder %v947, %v1229
    %vm1983 = vcmp.eq.s32.totalorder %v947, %v1243
    %vm1984 = vcmp.eq.s32.totalorder %v947, %v1257
    %vm1985 = vcmp.eq.s32.totalorder %v947, %v1271
    %vm1986 = vcmp.eq.s32.totalorder %v947, %v1285
    %vm1987 = vcmp.eq.s32.totalorder %v947, %v1299
    %vm1988 = vcmp.eq.s32.totalorder %v947, %v1313
    %vm1989 = vcmp.eq.s32.totalorder %v947, %v1327
    %vm1990 = vcmp.eq.s32.totalorder %v947, %v1341
    %vm1991 = vcmp.eq.s32.totalorder %v947, %v1355
    %vm1992 = vcmp.eq.s32.totalorder %v947, %v1369
    %vm1993 = vcmp.eq.s32.totalorder %v947, %v1383
    %vm1994 = vcmp.eq.s32.totalorder %v947, %v1397
    %vm1995 = vcmp.eq.s32.totalorder %v947, %v1411
    %vm1996 = vcmp.eq.s32.totalorder %v947, %v1425
    %vm1997 = vcmp.eq.s32.totalorder %v947, %v1439
    %vm1998 = vcmp.eq.s32.totalorder %v947, %v1453
    %vm1999 = vcmp.eq.s32.totalorder %v947, %v1467
    %vm2000 = vcmp.eq.s32.totalorder %v947, %v1481
    %vm2001 = vcmp.eq.s32.totalorder %v947, %v1495
    %vm2002 = vcmp.eq.s32.totalorder %v947, %v1509
    %vm2003 = vcmp.eq.s32.totalorder %v947, %v1523
    %vm2004 = vcmp.eq.s32.totalorder %v947, %v1537
    %vm2005 = vcmp.eq.s32.totalorder %v947, %v1551
    %vm2006 = vcmp.eq.s32.totalorder %v947, %v1565
    %vm2007 = vcmp.eq.s32.totalorder %v947, %v1579
    %vm2008 = vcmp.eq.s32.totalorder %v947, %v1593
    %vm2009 = vcmp.eq.s32.totalorder %v947, %v1607
    %vm2010 = vcmp.eq.s32.totalorder %v947, %v1621
    %vm2011 = vcmp.eq.s32.totalorder %v947, %v1635
    %vm2012 = vcmp.eq.s32.totalorder %v947, %v1649
    %vm2013 = vcmp.eq.s32.totalorder %v947, %v1663
    %vm2014 = vcmp.eq.s32.totalorder %v947, %v1677
    %vm2015 = vcmp.eq.s32.totalorder %v947, %v1691
    %vm2016 = vcmp.eq.s32.totalorder %v947, %v1705
    %vm2017 = vcmp.eq.s32.totalorder %v947, %v1719
    %vm2018 = vcmp.eq.s32.totalorder %v947, %v1733
    %vm2019 = vcmp.eq.s32.totalorder %v947, %v1747
    %vm2020 = vcmp.eq.s32.totalorder %v947, %v1761
    %vm2021 = vcmp.eq.s32.totalorder %v947, %v1775
    %vm2022 = vcmp.eq.s32.totalorder %v947, %v1789
    %vm2023 = vcmp.eq.s32.totalorder %v947, %v1803
    %vm2024 = vcmp.eq.s32.totalorder %v947, %v1817
    %vm2025 = vcmp.eq.s32.totalorder %v947, %v1831
    %vm2026 = vcmp.eq.s32.totalorder %v947, %v1845
    %vm2027 = vcmp.eq.s32.totalorder %v947, %v1859
    %vm2028 = vcmp.eq.s32.totalorder %v947, %v1873
    %vm2029 = vcmp.eq.s32.totalorder %v947, %v1887
    %vm2030 = vcmp.eq.s32.totalorder %v947, %v1901
    %vm2031 = vcmp.eq.s32.totalorder %v947, %v1915
    %vm2032 = vcmp.eq.s32.totalorder %v947, %v1929
    %vm2033 = vcmp.eq.s32.totalorder %v947, %v1943
    %vm2034 = vcmp.eq.s32.totalorder %v947, %v1957
    %vm2035 = vcmp.eq.s32.totalorder %v947, %v1971
    %v2036 = vsel %vm1972, 1, 0
    %v2037 = vsel %vm1973, 1, 0
    %v2038 = vsel %vm1974, 1, 0
    %v2039 = vsel %vm1975, 1, 0
    %v2040 = vsel %vm1976, 1, 0
    %v2041 = vsel %vm1977, 1, 0
    %v2042 = vsel %vm1978, 1, 0
    %v2043 = vsel %vm1979, 1, 0
    %v2044 = vsel %vm1980, 1, 0
    %v2045 = vsel %vm1981, 1, 0
    %v2046 = vsel %vm1982, 1, 0
    %v2047 = vsel %vm1983, 1, 0
    %v2048 = vsel %vm1984, 1, 0
    %v2049 = vsel %vm1985, 1, 0
    %v2050 = vsel %vm1986, 1, 0
    %v2051 = vsel %vm1987, 1, 0
    %v2052 = vsel %vm1988, 1, 0
    %v2053 = vsel %vm1989, 1, 0
    %v2054 = vsel %vm1990, 1, 0
    %v2055 = vsel %vm1991, 1, 0
    %v2056 = vsel %vm1992, 1, 0
    %v2057 = vsel %vm1993, 1, 0
    %v2058 = vsel %vm1994, 1, 0
    %v2059 = vsel %vm1995, 1, 0
    %v2060 = vsel %vm1996, 1, 0
    %v2061 = vsel %vm1997, 1, 0
    %v2062 = vsel %vm1998, 1, 0
    %v2063 = vsel %vm1999, 1, 0
    %v2064 = vsel %vm2000, 1, 0
    %v2065 = vsel %vm2001, 1, 0
    %v2066 = vsel %vm2002, 1, 0
    %v2067 = vsel %vm2003, 1, 0
    %v2068 = vsel %vm2004, 1, 0
    %v2069 = vsel %vm2005, 1, 0
    %v2070 = vsel %vm2006, 1, 0
    %v2071 = vsel %vm2007, 1, 0
    %v2072 = vsel %vm2008, 1, 0
    %v2073 = vsel %vm2009, 1, 0
    %v2074 = vsel %vm2010, 1, 0
    %v2075 = vsel %vm2011, 1, 0
    %v2076 = vsel %vm2012, 1, 0
    %v2077 = vsel %vm2013, 1, 0
    %v2078 = vsel %vm2014, 1, 0
    %v2079 = vsel %vm2015, 1, 0
    %v2080 = vsel %vm2016, 1, 0
    %v2081 = vsel %vm2017, 1, 0
    %v2082 = vsel %vm2018, 1, 0
    %v2083 = vsel %vm2019, 1, 0
    %v2084 = vsel %vm2020, 1, 0
    %v2085 = vsel %vm2021, 1, 0
    %v2086 = vsel %vm2022, 1, 0
    %v2087 = vsel %vm2023, 1, 0
    %v2088 = vsel %vm2024, 1, 0
    %v2089 = vsel %vm2025, 1, 0
    %v2090 = vsel %vm2026, 1, 0
    %v2091 = vsel %vm2027, 1, 0
    %v2092 = vsel %vm2028, 1, 0
    %v2093 = vsel %vm2029, 1, 0
    %v2094 = vsel %vm2030, 1, 0
    %v2095 = vsel %vm2031, 1, 0
    %v2096 = vsel %vm2032, 1, 0
    %v2097 = vsel %vm2033, 1, 0
    %v2098 = vsel %vm2034, 1, 0
    %v2099 = vsel %vm2035, 1, 0
    %v2100 = vcvt.s32.f32 %v2036
    %v2101 = vcvt.s32.f32 %v2037
    %v2102 = vcvt.s32.f32 %v2038
    %v2103 = vcvt.s32.f32 %v2039
    %v2104 = vcvt.s32.f32 %v2040
    %v2105 = vcvt.s32.f32 %v2041
    %v2106 = vcvt.s32.f32 %v2042
    %v2107 = vcvt.s32.f32 %v2043
    %v2108 = vcvt.s32.f32 %v2044
    %v2109 = vcvt.s32.f32 %v2045
    %v2110 = vcvt.s32.f32 %v2046
    %v2111 = vcvt.s32.f32 %v2047
    %v2112 = vcvt.s32.f32 %v2048
    %v2113 = vcvt.s32.f32 %v2049
    %v2114 = vcvt.s32.f32 %v2050
    %v2115 = vcvt.s32.f32 %v2051
    %v2116 = vcvt.s32.f32 %v2052
    %v2117 = vcvt.s32.f32 %v2053
    %v2118 = vcvt.s32.f32 %v2054
    %v2119 = vcvt.s32.f32 %v2055
    %v2120 = vcvt.s32.f32 %v2056
    %v2121 = vcvt.s32.f32 %v2057
    %v2122 = vcvt.s32.f32 %v2058
    %v2123 = vcvt.s32.f32 %v2059
    %v2124 = vcvt.s32.f32 %v2060
    %v2125 = vcvt.s32.f32 %v2061
    %v2126 = vcvt.s32.f32 %v2062
    %v2127 = vcvt.s32.f32 %v2063
    %v2128 = vcvt.s32.f32 %v2064
    %v2129 = vcvt.s32.f32 %v2065
    %v2130 = vcvt.s32.f32 %v2066
    %v2131 = vcvt.s32.f32 %v2067
    %v2132 = vcvt.s32.f32 %v2068
    %v2133 = vcvt.s32.f32 %v2069
    %v2134 = vcvt.s32.f32 %v2070
    %v2135 = vcvt.s32.f32 %v2071
    %v2136 = vcvt.s32.f32 %v2072
    %v2137 = vcvt.s32.f32 %v2073
    %v2138 = vcvt.s32.f32 %v2074
    %v2139 = vcvt.s32.f32 %v2075
    %v2140 = vcvt.s32.f32 %v2076
    %v2141 = vcvt.s32.f32 %v2077
    %v2142 = vcvt.s32.f32 %v2078
    %v2143 = vcvt.s32.f32 %v2079
    %v2144 = vcvt.s32.f32 %v2080
    %v2145 = vcvt.s32.f32 %v2081
    %v2146 = vcvt.s32.f32 %v2082
    %v2147 = vcvt.s32.f32 %v2083
    %v2148 = vcvt.s32.f32 %v2084
    %v2149 = vcvt.s32.f32 %v2085
    %v2150 = vcvt.s32.f32 %v2086
    %v2151 = vcvt.s32.f32 %v2087
    %v2152 = vcvt.s32.f32 %v2088
    %v2153 = vcvt.s32.f32 %v2089
    %v2154 = vcvt.s32.f32 %v2090
    %v2155 = vcvt.s32.f32 %v2091
    %v2156 = vcvt.s32.f32 %v2092
    %v2157 = vcvt.s32.f32 %v2093
    %v2158 = vcvt.s32.f32 %v2094
    %v2159 = vcvt.s32.f32 %v2095
    %v2160 = vcvt.s32.f32 %v2096
    %v2161 = vcvt.s32.f32 %v2097
    %v2162 = vcvt.s32.f32 %v2098
    %v2163 = vcvt.s32.f32 %v2099
    %2164 = vmatprep.subr.mxu0 0.0
    %2165 = vmatpush1.msra.mxu0 %v104
    %2166 = vmatprep.subr.mxu0 0.0
    %2167 = vmatpush1.msra.mxu0 %v103
    %2168 = vmatprep.subr.mxu0 0.0
    %2169 = vmatpush1.msra.mxu0 %v102
    %2170 = vmatprep.subr.mxu0 0.0
    %2171 = vmatpush1.msra.mxu0 %v101
    %2172 = vmatprep.subr.mxu0 0.0
    %2173 = vmatpush1.msra.mxu0 %v100
    %2174 = vmatprep.subr.mxu0 0.0
    %2175 = vmatpush1.msra.mxu0 %v99
    %2176 = vmatprep.subr.mxu0 0.0
    %2177 = vmatpush1.msra.mxu0 %v98
    %2178 = vmatprep.subr.mxu0 0.0
    %2179 = vmatpush1.msra.mxu0 %v97
    %2180 = vmatprep.subr.mxu0 0.0
    %2181 = vmatpush1.msra.mxu0 %v96
    %2182 = vmatprep.subr.mxu0 0.0
    %2183 = vmatpush1.msra.mxu0 %v95
    %2184 = vmatprep.subr.mxu0 0.0
    %2185 = vmatpush1.msra.mxu0 %v94
    %2186 = vmatprep.subr.mxu0 0.0
    %2187 = vmatpush1.msra.mxu0 %v93
    %2188 = vmatprep.subr.mxu0 0.0
    %2189 = vmatpush1.msra.mxu0 %v92
    %2190 = vmatprep.subr.mxu0 0.0
    %2191 = vmatpush1.msra.mxu0 %v91
    %2192 = vmatprep.subr.mxu0 0.0
    %2193 = vmatpush1.msra.mxu0 %v90
    %2194 = vmatprep.subr.mxu0 0.0
    %2195 = vmatpush1.msra.mxu0 %v89
    %2196 = vmatprep.subr.mxu0 0.0
    %2197 = vmatpush2.msra.mxu0 0.0
    %2198 = vmatprep.subr.mxu0 0.0
    %2199 = vmatpush2.msra.mxu0 0.0
    %2200 = vmatprep.subr.mxu0 0.0
    %2201 = vmatpush2.msra.mxu0 0.0
    %2202 = vmatprep.subr.mxu0 0.0
    %2203 = vmatpush2.msra.mxu0 0.0
    %2204 = vmatprep.subr.mxu0 0.0
    %2205 = vmatpush2.msra.mxu0 0.0
    %2206 = vmatprep.subr.mxu0 0.0
    %2207 = vmatpush2.msra.mxu0 0.0
    %2208 = vmatprep.subr.mxu0 0.0
    %2209 = vmatpush2.msra.mxu0 0.0
    %2210 = vmatprep.subr.mxu0 0.0
    %2211 = vmatpush2.msra.mxu0 0.0
    %2212 = vmatprep.subr.mxu0 0.0
    %2213 = vmatpush2.msra.mxu0 0.0
    %2214 = vmatprep.subr.mxu0 0.0
    %2215 = vmatpush2.msra.mxu0 0.0
    %2216 = vmatprep.subr.mxu0 0.0
    %2217 = vmatpush2.msra.mxu0 0.0
    %2218 = vmatprep.subr.mxu0 0.0
    %2219 = vmatpush2.msra.mxu0 0.0
    %2220 = vmatprep.subr.mxu0 0.0
    %2221 = vmatpush2.msra.mxu0 0.0
    %2222 = vmatprep.subr.mxu0 0.0
    %2223 = vmatpush2.msra.mxu0 0.0
    %2224 = vmatprep.subr.mxu0 0.0
    %2225 = vmatpush2.msra.mxu0 0.0
    %2226 = vmatprep.subr.mxu0 0.0
    %2227 = vmatpush2.msra.mxu0 0.0
    %2228 = vmatprep.mubr.f32.mxu0 0.0
    %2229 = vmatmul.mubr.f32.gmra.mxu0 %v2100
    %v2230 = vpop.f32.mrf.mxu0
    %v2231 = vadd.f32 0.0, %v2230
    %v2232 = vpop.f32.mrf.mxu0
    %2233 = vmatprep.mubr.f32.mxu0 0.0
    %2234 = vmatmul.mubr.f32.gmra.mxu0 %v2101
    %v2235 = vpop.f32.mrf.mxu0
    %v2236 = vadd.f32 0.0, %v2235
    %v2237 = vpop.f32.mrf.mxu0
    %2238 = vmatprep.mubr.f32.mxu0 0.0
    %2239 = vmatmul.mubr.f32.gmra.mxu0 %v2102
    %v2240 = vpop.f32.mrf.mxu0
    %v2241 = vadd.f32 0.0, %v2240
    %v2242 = vpop.f32.mrf.mxu0
    %2243 = vmatprep.mubr.f32.mxu0 0.0
    %2244 = vmatmul.mubr.f32.gmra.mxu0 %v2103
    %v2245 = vpop.f32.mrf.mxu0
    %v2246 = vadd.f32 0.0, %v2245
    %v2247 = vpop.f32.mrf.mxu0
    %2248 = vmatprep.mubr.f32.mxu0 0.0
    %2249 = vmatmul.mubr.f32.gmra.mxu0 %v2104
    %v2250 = vpop.f32.mrf.mxu0
    %v2251 = vadd.f32 0.0, %v2250
    %v2252 = vpop.f32.mrf.mxu0
    %2253 = vmatprep.mubr.f32.mxu0 0.0
    %2254 = vmatmul.mubr.f32.gmra.mxu0 %v2105
    %v2255 = vpop.f32.mrf.mxu0
    %v2256 = vadd.f32 0.0, %v2255
    %v2257 = vpop.f32.mrf.mxu0
    %2258 = vmatprep.mubr.f32.mxu0 0.0
    %2259 = vmatmul.mubr.f32.gmra.mxu0 %v2106
    %v2260 = vpop.f32.mrf.mxu0
    %v2261 = vadd.f32 0.0, %v2260
    %v2262 = vpop.f32.mrf.mxu0
    %2263 = vmatprep.mubr.f32.mxu0 0.0
    %2264 = vmatmul.mubr.f32.gmra.mxu0 %v2107
    %v2265 = vpop.f32.mrf.mxu0
    %v2266 = vadd.f32 0.0, %v2265
    %v2267 = vpop.f32.mrf.mxu0
    %2268 = vmatprep.mubr.f32.mxu0 0.0
    %2269 = vmatmul.mubr.f32.gmra.mxu0 %v2108
    %v2270 = vpop.f32.mrf.mxu0
    %v2271 = vadd.f32 0.0, %v2270
    %v2272 = vpop.f32.mrf.mxu0
    %2273 = vmatprep.mubr.f32.mxu0 0.0
    %2274 = vmatmul.mubr.f32.gmra.mxu0 %v2109
    %v2275 = vpop.f32.mrf.mxu0
    %v2276 = vadd.f32 0.0, %v2275
    %v2277 = vpop.f32.mrf.mxu0
    %2278 = vmatprep.mubr.f32.mxu0 0.0
    %2279 = vmatmul.mubr.f32.gmra.mxu0 %v2110
    %v2280 = vpop.f32.mrf.mxu0
    %v2281 = vadd.f32 0.0, %v2280
    %v2282 = vpop.f32.mrf.mxu0
    %2283 = vmatprep.mubr.f32.mxu0 0.0
    %2284 = vmatmul.mubr.f32.gmra.mxu0 %v2111
    %v2285 = vpop.f32.mrf.mxu0
    %v2286 = vadd.f32 0.0, %v2285
    %v2287 = vpop.f32.mrf.mxu0
    %2288 = vmatprep.mubr.f32.mxu0 0.0
    %2289 = vmatmul.mubr.f32.gmra.mxu0 %v2112
    %v2290 = vpop.f32.mrf.mxu0
    %v2291 = vadd.f32 0.0, %v2290
    %v2292 = vpop.f32.mrf.mxu0
    %2293 = vmatprep.mubr.f32.mxu0 0.0
    %2294 = vmatmul.mubr.f32.gmra.mxu0 %v2113
    %v2295 = vpop.f32.mrf.mxu0
    %v2296 = vadd.f32 0.0, %v2295
    %v2297 = vpop.f32.mrf.mxu0
    %2298 = vmatprep.mubr.f32.mxu0 0.0
    %2299 = vmatmul.mubr.f32.gmra.mxu0 %v2114
    %v2300 = vpop.f32.mrf.mxu0
    %v2301 = vadd.f32 0.0, %v2300
    %v2302 = vpop.f32.mrf.mxu0
    %2303 = vmatprep.mubr.f32.mxu0 0.0
    %2304 = vmatmul.mubr.f32.gmra.mxu0 %v2115
    %v2305 = vpop.f32.mrf.mxu0
    %v2306 = vadd.f32 0.0, %v2305
    %v2307 = vpop.f32.mrf.mxu0
    %2308 = vmatprep.mubr.f32.mxu0 0.0
    %2309 = vmatmul.mubr.f32.gmra.mxu0 %v2116
    %v2310 = vpop.f32.mrf.mxu0
    %v2311 = vadd.f32 0.0, %v2310
    %v2312 = vpop.f32.mrf.mxu0
    %2313 = vmatprep.mubr.f32.mxu0 0.0
    %2314 = vmatmul.mubr.f32.gmra.mxu0 %v2117
    %v2315 = vpop.f32.mrf.mxu0
    %v2316 = vadd.f32 0.0, %v2315
    %v2317 = vpop.f32.mrf.mxu0
    %2318 = vmatprep.mubr.f32.mxu0 0.0
    %2319 = vmatmul.mubr.f32.gmra.mxu0 %v2118
    %v2320 = vpop.f32.mrf.mxu0
    %v2321 = vadd.f32 0.0, %v2320
    %v2322 = vpop.f32.mrf.mxu0
    %2323 = vmatprep.mubr.f32.mxu0 0.0
    %2324 = vmatmul.mubr.f32.gmra.mxu0 %v2119
    %v2325 = vpop.f32.mrf.mxu0
    %v2326 = vadd.f32 0.0, %v2325
    %v2327 = vpop.f32.mrf.mxu0
    %2328 = vmatprep.mubr.f32.mxu0 0.0
    %2329 = vmatmul.mubr.f32.gmra.mxu0 %v2120
    %v2330 = vpop.f32.mrf.mxu0
    %v2331 = vadd.f32 0.0, %v2330
    %v2332 = vpop.f32.mrf.mxu0
    %2333 = vmatprep.mubr.f32.mxu0 0.0
    %2334 = vmatmul.mubr.f32.gmra.mxu0 %v2121
    %v2335 = vpop.f32.mrf.mxu0
    %v2336 = vadd.f32 0.0, %v2335
    %v2337 = vpop.f32.mrf.mxu0
    %2338 = vmatprep.mubr.f32.mxu0 0.0
    %2339 = vmatmul.mubr.f32.gmra.mxu0 %v2122
    %v2340 = vpop.f32.mrf.mxu0
    %v2341 = vadd.f32 0.0, %v2340
    %v2342 = vpop.f32.mrf.mxu0
    %2343 = vmatprep.mubr.f32.mxu0 0.0
    %2344 = vmatmul.mubr.f32.gmra.mxu0 %v2123
    %v2345 = vpop.f32.mrf.mxu0
    %v2346 = vadd.f32 0.0, %v2345
    %v2347 = vpop.f32.mrf.mxu0
    %2348 = vmatprep.mubr.f32.mxu0 0.0
    %2349 = vmatmul.mubr.f32.gmra.mxu0 %v2124
    %v2350 = vpop.f32.mrf.mxu0
    %v2351 = vadd.f32 0.0, %v2350
    %v2352 = vpop.f32.mrf.mxu0
    %2353 = vmatprep.mubr.f32.mxu0 0.0
    %2354 = vmatmul.mubr.f32.gmra.mxu0 %v2125
    %v2355 = vpop.f32.mrf.mxu0
    %v2356 = vadd.f32 0.0, %v2355
    %v2357 = vpop.f32.mrf.mxu0
    %2358 = vmatprep.mubr.f32.mxu0 0.0
    %2359 = vmatmul.mubr.f32.gmra.mxu0 %v2126
    %v2360 = vpop.f32.mrf.mxu0
    %v2361 = vadd.f32 0.0, %v2360
    %v2362 = vpop.f32.mrf.mxu0
    %2363 = vmatprep.mubr.f32.mxu0 0.0
    %2364 = vmatmul.mubr.f32.gmra.mxu0 %v2127
    %v2365 = vpop.f32.mrf.mxu0
    %v2366 = vadd.f32 0.0, %v2365
    %v2367 = vpop.f32.mrf.mxu0
    %2368 = vmatprep.mubr.f32.mxu0 0.0
    %2369 = vmatmul.mubr.f32.gmra.mxu0 %v2128
    %v2370 = vpop.f32.mrf.mxu0
    %v2371 = vadd.f32 0.0, %v2370
    %v2372 = vpop.f32.mrf.mxu0
    %2373 = vmatprep.mubr.f32.mxu0 0.0
    %2374 = vmatmul.mubr.f32.gmra.mxu0 %v2129
    %v2375 = vpop.f32.mrf.mxu0
    %v2376 = vadd.f32 0.0, %v2375
    %v2377 = vpop.f32.mrf.mxu0
    %2378 = vmatprep.mubr.f32.mxu0 0.0
    %2379 = vmatmul.mubr.f32.gmra.mxu0 %v2130
    %v2380 = vpop.f32.mrf.mxu0
    %v2381 = vadd.f32 0.0, %v2380
    %v2382 = vpop.f32.mrf.mxu0
    %2383 = vmatprep.mubr.f32.mxu0 0.0
    %2384 = vmatmul.mubr.f32.gmra.mxu0 %v2131
    %v2385 = vpop.f32.mrf.mxu0
    %v2386 = vadd.f32 0.0, %v2385
    %v2387 = vpop.f32.mrf.mxu0
    %2388 = vmatprep.mubr.f32.mxu0 0.0
    %2389 = vmatmul.mubr.f32.gmra.mxu0 %v2132
    %v2390 = vpop.f32.mrf.mxu0
    %v2391 = vadd.f32 0.0, %v2390
    %v2392 = vpop.f32.mrf.mxu0
    %2393 = vmatprep.mubr.f32.mxu0 0.0
    %2394 = vmatmul.mubr.f32.gmra.mxu0 %v2133
    %v2395 = vpop.f32.mrf.mxu0
    %v2396 = vadd.f32 0.0, %v2395
    %v2397 = vpop.f32.mrf.mxu0
    %2398 = vmatprep.mubr.f32.mxu0 0.0
    %2399 = vmatmul.mubr.f32.gmra.mxu0 %v2134
    %v2400 = vpop.f32.mrf.mxu0
    %v2401 = vadd.f32 0.0, %v2400
    %v2402 = vpop.f32.mrf.mxu0
    %2403 = vmatprep.mubr.f32.mxu0 0.0
    %2404 = vmatmul.mubr.f32.gmra.mxu0 %v2135
    %v2405 = vpop.f32.mrf.mxu0
    %v2406 = vadd.f32 0.0, %v2405
    %v2407 = vpop.f32.mrf.mxu0
    %2408 = vmatprep.mubr.f32.mxu0 0.0
    %2409 = vmatmul.mubr.f32.gmra.mxu0 %v2136
    %v2410 = vpop.f32.mrf.mxu0
    %v2411 = vadd.f32 0.0, %v2410
    %v2412 = vpop.f32.mrf.mxu0
    %2413 = vmatprep.mubr.f32.mxu0 0.0
    %2414 = vmatmul.mubr.f32.gmra.mxu0 %v2137
    %v2415 = vpop.f32.mrf.mxu0
    %v2416 = vadd.f32 0.0, %v2415
    %v2417 = vpop.f32.mrf.mxu0
    %2418 = vmatprep.mubr.f32.mxu0 0.0
    %2419 = vmatmul.mubr.f32.gmra.mxu0 %v2138
    %v2420 = vpop.f32.mrf.mxu0
    %v2421 = vadd.f32 0.0, %v2420
    %v2422 = vpop.f32.mrf.mxu0
    %2423 = vmatprep.mubr.f32.mxu0 0.0
    %2424 = vmatmul.mubr.f32.gmra.mxu0 %v2139
    %v2425 = vpop.f32.mrf.mxu0
    %v2426 = vadd.f32 0.0, %v2425
    %v2427 = vpop.f32.mrf.mxu0
    %2428 = vmatprep.mubr.f32.mxu0 0.0
    %2429 = vmatmul.mubr.f32.gmra.mxu0 %v2140
    %v2430 = vpop.f32.mrf.mxu0
    %v2431 = vadd.f32 0.0, %v2430
    %v2432 = vpop.f32.mrf.mxu0
    %2433 = vmatprep.mubr.f32.mxu0 0.0
    %2434 = vmatmul.mubr.f32.gmra.mxu0 %v2141
    %v2435 = vpop.f32.mrf.mxu0
    %v2436 = vadd.f32 0.0, %v2435
    %v2437 = vpop.f32.mrf.mxu0
    %2438 = vmatprep.mubr.f32.mxu0 0.0
    %2439 = vmatmul.mubr.f32.gmra.mxu0 %v2142
    %v2440 = vpop.f32.mrf.mxu0
    %v2441 = vadd.f32 0.0, %v2440
    %v2442 = vpop.f32.mrf.mxu0
    %2443 = vmatprep.mubr.f32.mxu0 0.0
    %2444 = vmatmul.mubr.f32.gmra.mxu0 %v2143
    %v2445 = vpop.f32.mrf.mxu0
    %v2446 = vadd.f32 0.0, %v2445
    %v2447 = vpop.f32.mrf.mxu0
    %2448 = vmatprep.mubr.f32.mxu0 0.0
    %2449 = vmatmul.mubr.f32.gmra.mxu0 %v2144
    %v2450 = vpop.f32.mrf.mxu0
    %v2451 = vadd.f32 0.0, %v2450
    %v2452 = vpop.f32.mrf.mxu0
    %2453 = vmatprep.mubr.f32.mxu0 0.0
    %2454 = vmatmul.mubr.f32.gmra.mxu0 %v2145
    %v2455 = vpop.f32.mrf.mxu0
    %v2456 = vadd.f32 0.0, %v2455
    %v2457 = vpop.f32.mrf.mxu0
    %2458 = vmatprep.mubr.f32.mxu0 0.0
    %2459 = vmatmul.mubr.f32.gmra.mxu0 %v2146
    %v2460 = vpop.f32.mrf.mxu0
    %v2461 = vadd.f32 0.0, %v2460
    %v2462 = vpop.f32.mrf.mxu0
    %2463 = vmatprep.mubr.f32.mxu0 0.0
    %2464 = vmatmul.mubr.f32.gmra.mxu0 %v2147
    %v2465 = vpop.f32.mrf.mxu0
    %v2466 = vadd.f32 0.0, %v2465
    %v2467 = vpop.f32.mrf.mxu0
    %2468 = vmatprep.mubr.f32.mxu0 0.0
    %2469 = vmatmul.mubr.f32.gmra.mxu0 %v2148
    %v2470 = vpop.f32.mrf.mxu0
    %v2471 = vadd.f32 0.0, %v2470
    %v2472 = vpop.f32.mrf.mxu0
    %2473 = vmatprep.mubr.f32.mxu0 0.0
    %2474 = vmatmul.mubr.f32.gmra.mxu0 %v2149
    %v2475 = vpop.f32.mrf.mxu0
    %v2476 = vadd.f32 0.0, %v2475
    %v2477 = vpop.f32.mrf.mxu0
    %2478 = vmatprep.mubr.f32.mxu0 0.0
    %2479 = vmatmul.mubr.f32.gmra.mxu0 %v2150
    %v2480 = vpop.f32.mrf.mxu0
    %v2481 = vadd.f32 0.0, %v2480
    %v2482 = vpop.f32.mrf.mxu0
    %2483 = vmatprep.mubr.f32.mxu0 0.0
    %2484 = vmatmul.mubr.f32.gmra.mxu0 %v2151
    %v2485 = vpop.f32.mrf.mxu0
    %v2486 = vadd.f32 0.0, %v2485
    %v2487 = vpop.f32.mrf.mxu0
    %2488 = vmatprep.mubr.f32.mxu0 0.0
    %2489 = vmatmul.mubr.f32.gmra.mxu0 %v2152
    %v2490 = vpop.f32.mrf.mxu0
    %v2491 = vadd.f32 0.0, %v2490
    %v2492 = vpop.f32.mrf.mxu0
    %2493 = vmatprep.mubr.f32.mxu0 0.0
    %2494 = vmatmul.mubr.f32.gmra.mxu0 %v2153
    %v2495 = vpop.f32.mrf.mxu0
    %v2496 = vadd.f32 0.0, %v2495
    %v2497 = vpop.f32.mrf.mxu0
    %2498 = vmatprep.mubr.f32.mxu0 0.0
    %2499 = vmatmul.mubr.f32.gmra.mxu0 %v2154
    %v2500 = vpop.f32.mrf.mxu0
    %v2501 = vadd.f32 0.0, %v2500
    %v2502 = vpop.f32.mrf.mxu0
    %2503 = vmatprep.mubr.f32.mxu0 0.0
    %2504 = vmatmul.mubr.f32.gmra.mxu0 %v2155
    %v2505 = vpop.f32.mrf.mxu0
    %v2506 = vadd.f32 0.0, %v2505
    %v2507 = vpop.f32.mrf.mxu0
    %2508 = vmatprep.mubr.f32.mxu0 0.0
    %2509 = vmatmul.mubr.f32.gmra.mxu0 %v2156
    %v2510 = vpop.f32.mrf.mxu0
    %v2511 = vadd.f32 0.0, %v2510
    %v2512 = vpop.f32.mrf.mxu0
    %2513 = vmatprep.mubr.f32.mxu0 0.0
    %2514 = vmatmul.mubr.f32.gmra.mxu0 %v2157
    %v2515 = vpop.f32.mrf.mxu0
    %v2516 = vadd.f32 0.0, %v2515
    %v2517 = vpop.f32.mrf.mxu0
    %2518 = vmatprep.mubr.f32.mxu0 0.0
    %2519 = vmatmul.mubr.f32.gmra.mxu0 %v2158
    %v2520 = vpop.f32.mrf.mxu0
    %v2521 = vadd.f32 0.0, %v2520
    %v2522 = vpop.f32.mrf.mxu0
    %2523 = vmatprep.mubr.f32.mxu0 0.0
    %2524 = vmatmul.mubr.f32.gmra.mxu0 %v2159
    %v2525 = vpop.f32.mrf.mxu0
    %v2526 = vadd.f32 0.0, %v2525
    %v2527 = vpop.f32.mrf.mxu0
    %2528 = vmatprep.mubr.f32.mxu0 0.0
    %2529 = vmatmul.mubr.f32.gmra.mxu0 %v2160
    %v2530 = vpop.f32.mrf.mxu0
    %v2531 = vadd.f32 0.0, %v2530
    %v2532 = vpop.f32.mrf.mxu0
    %2533 = vmatprep.mubr.f32.mxu0 0.0
    %2534 = vmatmul.mubr.f32.gmra.mxu0 %v2161
    %v2535 = vpop.f32.mrf.mxu0
    %v2536 = vadd.f32 0.0, %v2535
    %v2537 = vpop.f32.mrf.mxu0
    %2538 = vmatprep.mubr.f32.mxu0 0.0
    %2539 = vmatmul.mubr.f32.gmra.mxu0 %v2162
    %v2540 = vpop.f32.mrf.mxu0
    %v2541 = vadd.f32 0.0, %v2540
    %v2542 = vpop.f32.mrf.mxu0
    %2543 = vmatprep.mubr.f32.mxu0 0.0
    %2544 = vmatmul.mubr.f32.gmra.mxu0 %v2163
    %v2545 = vpop.f32.mrf.mxu0
    %v2546 = vadd.f32 0.0, %v2545
    %v2547 = vpop.f32.mrf.mxu0
    %2548 = vdwg.mxu0
    %2549 = vst.msk [vmem:[%s4] sm:$0xff] %vm106, %v2231
    %2550 = vst.msk [vmem:[%s4 + $0x8] sm:$0xff] %vm106, %v2236
    %2551 = vst.msk [vmem:[%s4 + $0x10] sm:$0xff] %vm106, %v2241
    %2552 = vst.msk [vmem:[%s4 + $0x18] sm:$0xff] %vm106, %v2246
    %2553 = vst.msk [vmem:[%s4 + $0x20] sm:$0xff] %vm106, %v2251
    %2554 = vst.msk [vmem:[%s4 + $0x28] sm:$0xff] %vm106, %v2256
    %2555 = vst.msk [vmem:[%s4 + $0x30] sm:$0xff] %vm106, %v2261
    %2556 = vst.msk [vmem:[%s4 + $0x38] sm:$0xff] %vm106, %v2266
    %2557 = vst.msk [vmem:[%s4 + $0x40] sm:$0xff] %vm106, %v2271
    %2558 = vst.msk [vmem:[%s4 + $0x48] sm:$0xff] %vm106, %v2276
    %2559 = vst.msk [vmem:[%s4 + $0x50] sm:$0xff] %vm106, %v2281
    %2560 = vst.msk [vmem:[%s4 + $0x58] sm:$0xff] %vm106, %v2286
    %2561 = vst.msk [vmem:[%s4 + $0x60] sm:$0xff] %vm106, %v2291
    %2562 = vst.msk [vmem:[%s4 + $0x68] sm:$0xff] %vm106, %v2296
    %2563 = vst.msk [vmem:[%s4 + $0x70] sm:$0xff] %vm106, %v2301
    %2564 = vst.msk [vmem:[%s4 + $0x78] sm:$0xff] %vm106, %v2306
    %2565 = vst.msk [vmem:[%s4 + $0x80] sm:$0xff] %vm106, %v2311
    %2566 = vst.msk [vmem:[%s4 + $0x88] sm:$0xff] %vm106, %v2316
    %2567 = vst.msk [vmem:[%s4 + $0x90] sm:$0xff] %vm106, %v2321
    %2568 = vst.msk [vmem:[%s4 + $0x98] sm:$0xff] %vm106, %v2326
    %2569 = vst.msk [vmem:[%s4 + $0xa0] sm:$0xff] %vm106, %v2331
    %2570 = vst.msk [vmem:[%s4 + $0xa8] sm:$0xff] %vm106, %v2336
    %2571 = vst.msk [vmem:[%s4 + $0xb0] sm:$0xff] %vm106, %v2341
    %2572 = vst.msk [vmem:[%s4 + $0xb8] sm:$0xff] %vm106, %v2346
    %2573 = vst.msk [vmem:[%s4 + $0xc0] sm:$0xff] %vm106, %v2351
    %2574 = vst.msk [vmem:[%s4 + $0xc8] sm:$0xff] %vm106, %v2356
    %2575 = vst.msk [vmem:[%s4 + $0xd0] sm:$0xff] %vm106, %v2361
    %2576 = vst.msk [vmem:[%s4 + $0xd8] sm:$0xff] %vm106, %v2366
    %2577 = vst.msk [vmem:[%s4 + $0xe0] sm:$0xff] %vm106, %v2371
    %2578 = vst.msk [vmem:[%s4 + $0xe8] sm:$0xff] %vm106, %v2376
    %2579 = vst.msk [vmem:[%s4 + $0xf0] sm:$0xff] %vm106, %v2381
    %2580 = vst.msk [vmem:[%s4 + $0xf8] sm:$0xff] %vm106, %v2386
    %2581 = vst.msk [vmem:[%s4 + $0x100] sm:$0xff] %vm106, %v2391
    %2582 = vst.msk [vmem:[%s4 + $0x108] sm:$0xff] %vm106, %v2396
    %2583 = vst.msk [vmem:[%s4 + $0x110] sm:$0xff] %vm106, %v2401
    %2584 = vst.msk [vmem:[%s4 + $0x118] sm:$0xff] %vm106, %v2406
    %2585 = vst.msk [vmem:[%s4 + $0x120] sm:$0xff] %vm106, %v2411
    %2586 = vst.msk [vmem:[%s4 + $0x128] sm:$0xff] %vm106, %v2416
    %2587 = vst.msk [vmem:[%s4 + $0x130] sm:$0xff] %vm106, %v2421
    %2588 = vst.msk [vmem:[%s4 + $0x138] sm:$0xff] %vm106, %v2426
    %2589 = vst.msk [vmem:[%s4 + $0x140] sm:$0xff] %vm106, %v2431
    %2590 = vst.msk [vmem:[%s4 + $0x148] sm:$0xff] %vm106, %v2436
    %2591 = vst.msk [vmem:[%s4 + $0x150] sm:$0xff] %vm106, %v2441
    %2592 = vst.msk [vmem:[%s4 + $0x158] sm:$0xff] %vm106, %v2446
    %2593 = vst.msk [vmem:[%s4 + $0x160] sm:$0xff] %vm106, %v2451
    %2594 = vst.msk [vmem:[%s4 + $0x168] sm:$0xff] %vm106, %v2456
    %2595 = vst.msk [vmem:[%s4 + $0x170] sm:$0xff] %vm106, %v2461
    %2596 = vst.msk [vmem:[%s4 + $0x178] sm:$0xff] %vm106, %v2466
    %2597 = vst.msk [vmem:[%s4 + $0x180] sm:$0xff] %vm106, %v2471
    %2598 = vst.msk [vmem:[%s4 + $0x188] sm:$0xff] %vm106, %v2476
    %2599 = vst.msk [vmem:[%s4 + $0x190] sm:$0xff] %vm106, %v2481
    %2600 = vst.msk [vmem:[%s4 + $0x198] sm:$0xff] %vm106, %v2486
    %2601 = vst.msk [vmem:[%s4 + $0x1a0] sm:$0xff] %vm106, %v2491
    %2602 = vst.msk [vmem:[%s4 + $0x1a8] sm:$0xff] %vm106, %v2496
    %2603 = vst.msk [vmem:[%s4 + $0x1b0] sm:$0xff] %vm106, %v2501
    %2604 = vst.msk [vmem:[%s4 + $0x1b8] sm:$0xff] %vm106, %v2506
    %2605 = vst.msk [vmem:[%s4 + $0x1c0] sm:$0xff] %vm106, %v2511
    %2606 = vst.msk [vmem:[%s4 + $0x1c8] sm:$0xff] %vm106, %v2516
    %2607 = vst.msk [vmem:[%s4 + $0x1d0] sm:$0xff] %vm106, %v2521
    %2608 = vst.msk [vmem:[%s4 + $0x1d8] sm:$0xff] %vm106, %v2526
    %2609 = vst.msk [vmem:[%s4 + $0x1e0] sm:$0xff] %vm106, %v2531
    %2610 = vst.msk [vmem:[%s4 + $0x1e8] sm:$0xff] %vm106, %v2536
    %2611 = vst.msk [vmem:[%s4 + $0x1f0] sm:$0xff] %vm106, %v2541
    %2612 = vst.msk [vmem:[%s4 + $0x1f8] sm:$0xff] %vm106, %v2546
    %vm2613 = vcmask 7168
    %2614 = vst.msk [vmem:[%s5] sm:$0xff] %vm2613, %v1089
    %2615 = vst.msk [vmem:[%s5 + $0x8] sm:$0xff] %vm2613, %v1103
    %2616 = vst.msk [vmem:[%s5 + $0x10] sm:$0xff] %vm2613, %v1117
    %2617 = vst.msk [vmem:[%s5 + $0x18] sm:$0xff] %vm2613, %v1131
    %2618 = vst.msk [vmem:[%s5 + $0x20] sm:$0xff] %vm2613, %v1145
    %2619 = vst.msk [vmem:[%s5 + $0x28] sm:$0xff] %vm2613, %v1159
    %2620 = vst.msk [vmem:[%s5 + $0x30] sm:$0xff] %vm2613, %v1173
    %2621 = vst.msk [vmem:[%s5 + $0x38] sm:$0xff] %vm2613, %v1187
    %2622 = vst.msk [vmem:[%s5 + $0x40] sm:$0xff] %vm2613, %v1201
    %2623 = vst.msk [vmem:[%s5 + $0x48] sm:$0xff] %vm2613, %v1215
    %2624 = vst.msk [vmem:[%s5 + $0x50] sm:$0xff] %vm2613, %v1229
    %2625 = vst.msk [vmem:[%s5 + $0x58] sm:$0xff] %vm2613, %v1243
    %2626 = vst.msk [vmem:[%s5 + $0x60] sm:$0xff] %vm2613, %v1257
    %2627 = vst.msk [vmem:[%s5 + $0x68] sm:$0xff] %vm2613, %v1271
    %2628 = vst.msk [vmem:[%s5 + $0x70] sm:$0xff] %vm2613, %v1285
    %2629 = vst.msk [vmem:[%s5 + $0x78] sm:$0xff] %vm2613, %v1299
    %2630 = vst.msk [vmem:[%s5 + $0x80] sm:$0xff] %vm2613, %v1313
    %2631 = vst.msk [vmem:[%s5 + $0x88] sm:$0xff] %vm2613, %v1327
    %2632 = vst.msk [vmem:[%s5 + $0x90] sm:$0xff] %vm2613, %v1341
    %2633 = vst.msk [vmem:[%s5 + $0x98] sm:$0xff] %vm2613, %v1355
    %2634 = vst.msk [vmem:[%s5 + $0xa0] sm:$0xff] %vm2613, %v1369
    %2635 = vst.msk [vmem:[%s5 + $0xa8] sm:$0xff] %vm2613, %v1383
    %2636 = vst.msk [vmem:[%s5 + $0xb0] sm:$0xff] %vm2613, %v1397
    %2637 = vst.msk [vmem:[%s5 + $0xb8] sm:$0xff] %vm2613, %v1411
    %2638 = vst.msk [vmem:[%s5 + $0xc0] sm:$0xff] %vm2613, %v1425
    %2639 = vst.msk [vmem:[%s5 + $0xc8] sm:$0xff] %vm2613, %v1439
    %2640 = vst.msk [vmem:[%s5 + $0xd0] sm:$0xff] %vm2613, %v1453
    %2641 = vst.msk [vmem:[%s5 + $0xd8] sm:$0xff] %vm2613, %v1467
    %2642 = vst.msk [vmem:[%s5 + $0xe0] sm:$0xff] %vm2613, %v1481
    %2643 = vst.msk [vmem:[%s5 + $0xe8] sm:$0xff] %vm2613, %v1495
    %2644 = vst.msk [vmem:[%s5 + $0xf0] sm:$0xff] %vm2613, %v1509
    %2645 = vst.msk [vmem:[%s5 + $0xf8] sm:$0xff] %vm2613, %v1523
    %2646 = vst.msk [vmem:[%s5 + $0x100] sm:$0xff] %vm2613, %v1537
    %2647 = vst.msk [vmem:[%s5 + $0x108] sm:$0xff] %vm2613, %v1551
    %2648 = vst.msk [vmem:[%s5 + $0x110] sm:$0xff] %vm2613, %v1565
    %2649 = vst.msk [vmem:[%s5 + $0x118] sm:$0xff] %vm2613, %v1579
    %2650 = vst.msk [vmem:[%s5 + $0x120] sm:$0xff] %vm2613, %v1593
    %2651 = vst.msk [vmem:[%s5 + $0x128] sm:$0xff] %vm2613, %v1607
    %2652 = vst.msk [vmem:[%s5 + $0x130] sm:$0xff] %vm2613, %v1621
    %2653 = vst.msk [vmem:[%s5 + $0x138] sm:$0xff] %vm2613, %v1635
    %2654 = vst.msk [vmem:[%s5 + $0x140] sm:$0xff] %vm2613, %v1649
    %2655 = vst.msk [vmem:[%s5 + $0x148] sm:$0xff] %vm2613, %v1663
    %2656 = vst.msk [vmem:[%s5 + $0x150] sm:$0xff] %vm2613, %v1677
    %2657 = vst.msk [vmem:[%s5 + $0x158] sm:$0xff] %vm2613, %v1691
    %2658 = vst.msk [vmem:[%s5 + $0x160] sm:$0xff] %vm2613, %v1705
    %2659 = vst.msk [vmem:[%s5 + $0x168] sm:$0xff] %vm2613, %v1719
    %2660 = vst.msk [vmem:[%s5 + $0x170] sm:$0xff] %vm2613, %v1733
    %2661 = vst.msk [vmem:[%s5 + $0x178] sm:$0xff] %vm2613, %v1747
    %2662 = vst.msk [vmem:[%s5 + $0x180] sm:$0xff] %vm2613, %v1761
    %2663 = vst.msk [vmem:[%s5 + $0x188] sm:$0xff] %vm2613, %v1775
    %2664 = vst.msk [vmem:[%s5 + $0x190] sm:$0xff] %vm2613, %v1789
    %2665 = vst.msk [vmem:[%s5 + $0x198] sm:$0xff] %vm2613, %v1803
    %2666 = vst.msk [vmem:[%s5 + $0x1a0] sm:$0xff] %vm2613, %v1817
    %2667 = vst.msk [vmem:[%s5 + $0x1a8] sm:$0xff] %vm2613, %v1831
    %2668 = vst.msk [vmem:[%s5 + $0x1b0] sm:$0xff] %vm2613, %v1845
    %2669 = vst.msk [vmem:[%s5 + $0x1b8] sm:$0xff] %vm2613, %v1859
    %2670 = vst.msk [vmem:[%s5 + $0x1c0] sm:$0xff] %vm2613, %v1873
    %2671 = vst.msk [vmem:[%s5 + $0x1c8] sm:$0xff] %vm2613, %v1887
    %2672 = vst.msk [vmem:[%s5 + $0x1d0] sm:$0xff] %vm2613, %v1901
    %2673 = vst.msk [vmem:[%s5 + $0x1d8] sm:$0xff] %vm2613, %v1915
    %2674 = vst.msk [vmem:[%s5 + $0x1e0] sm:$0xff] %vm2613, %v1929
    %2675 = vst.msk [vmem:[%s5 + $0x1e8] sm:$0xff] %vm2613, %v1943
    %2676 = vst.msk [vmem:[%s5 + $0x1f0] sm:$0xff] %vm2613, %v1957
    %2677 = vst.msk [vmem:[%s5 + $0x1f8] sm:$0xff] %vm2613, %v1971
    %v2678 = vsub.f32 %v2231, %v21
    %v2679 = vsub.f32 %v2236, %v22
    %v2680 = vsub.f32 %v2241, %v23
    %v2681 = vsub.f32 %v2246, %v24
    %v2682 = vsub.f32 %v2251, %v25
    %v2683 = vsub.f32 %v2256, %v26
    %v2684 = vsub.f32 %v2261, %v27
    %v2685 = vsub.f32 %v2266, %v28
    %v2686 = vsub.f32 %v2271, %v29
    %v2687 = vsub.f32 %v2276, %v30
    %v2688 = vsub.f32 %v2281, %v31
    %v2689 = vsub.f32 %v2286, %v32
    %v2690 = vsub.f32 %v2291, %v33
    %v2691 = vsub.f32 %v2296, %v34
    %v2692 = vsub.f32 %v2301, %v35
    %v2693 = vsub.f32 %v2306, %v36
    %v2694 = vsub.f32 %v2311, %v37
    %v2695 = vsub.f32 %v2316, %v38
    %v2696 = vsub.f32 %v2321, %v39
    %v2697 = vsub.f32 %v2326, %v40
    %v2698 = vsub.f32 %v2331, %v41
    %v2699 = vsub.f32 %v2336, %v42
    %v2700 = vsub.f32 %v2341, %v43
    %v2701 = vsub.f32 %v2346, %v44
    %v2702 = vsub.f32 %v2351, %v45
    %v2703 = vsub.f32 %v2356, %v46
    %v2704 = vsub.f32 %v2361, %v47
    %v2705 = vsub.f32 %v2366, %v48
    %v2706 = vsub.f32 %v2371, %v49
    %v2707 = vsub.f32 %v2376, %v50
    %v2708 = vsub.f32 %v2381, %v51
    %v2709 = vsub.f32 %v2386, %v52
    %v2710 = vsub.f32 %v2391, %v53
    %v2711 = vsub.f32 %v2396, %v54
    %v2712 = vsub.f32 %v2401, %v55
    %v2713 = vsub.f32 %v2406, %v56
    %v2714 = vsub.f32 %v2411, %v57
    %v2715 = vsub.f32 %v2416, %v58
    %v2716 = vsub.f32 %v2421, %v59
    %v2717 = vsub.f32 %v2426, %v60
    %v2718 = vsub.f32 %v2431, %v61
    %v2719 = vsub.f32 %v2436, %v62
    %v2720 = vsub.f32 %v2441, %v63
    %v2721 = vsub.f32 %v2446, %v64
    %v2722 = vsub.f32 %v2451, %v65
    %v2723 = vsub.f32 %v2456, %v66
    %v2724 = vsub.f32 %v2461, %v67
    %v2725 = vsub.f32 %v2466, %v68
    %v2726 = vsub.f32 %v2471, %v69
    %v2727 = vsub.f32 %v2476, %v70
    %v2728 = vsub.f32 %v2481, %v71
    %v2729 = vsub.f32 %v2486, %v72
    %v2730 = vsub.f32 %v2491, %v73
    %v2731 = vsub.f32 %v2496, %v74
    %v2732 = vsub.f32 %v2501, %v75
    %v2733 = vsub.f32 %v2506, %v76
    %v2734 = vsub.f32 %v2511, %v77
    %v2735 = vsub.f32 %v2516, %v78
    %v2736 = vsub.f32 %v2521, %v79
    %v2737 = vsub.f32 %v2526, %v80
    %v2738 = vsub.f32 %v2531, %v81
    %v2739 = vsub.f32 %v2536, %v82
    %v2740 = vsub.f32 %v2541, %v83
    %v2741 = vsub.f32 %v2546, %v84
    %v2742 = vmul.f32 %v2678, %v2678
    %v2743 = vmul.f32 %v2679, %v2679
    %v2744 = vmul.f32 %v2680, %v2680
    %v2745 = vmul.f32 %v2681, %v2681
    %v2746 = vmul.f32 %v2682, %v2682
    %v2747 = vmul.f32 %v2683, %v2683
    %v2748 = vmul.f32 %v2684, %v2684
    %v2749 = vmul.f32 %v2685, %v2685
    %v2750 = vmul.f32 %v2686, %v2686
    %v2751 = vmul.f32 %v2687, %v2687
    %v2752 = vmul.f32 %v2688, %v2688
    %v2753 = vmul.f32 %v2689, %v2689
    %v2754 = vmul.f32 %v2690, %v2690
    %v2755 = vmul.f32 %v2691, %v2691
    %v2756 = vmul.f32 %v2692, %v2692
    %v2757 = vmul.f32 %v2693, %v2693
    %v2758 = vmul.f32 %v2694, %v2694
    %v2759 = vmul.f32 %v2695, %v2695
    %v2760 = vmul.f32 %v2696, %v2696
    %v2761 = vmul.f32 %v2697, %v2697
    %v2762 = vmul.f32 %v2698, %v2698
    %v2763 = vmul.f32 %v2699, %v2699
    %v2764 = vmul.f32 %v2700, %v2700
    %v2765 = vmul.f32 %v2701, %v2701
    %v2766 = vmul.f32 %v2702, %v2702
    %v2767 = vmul.f32 %v2703, %v2703
    %v2768 = vmul.f32 %v2704, %v2704
    %v2769 = vmul.f32 %v2705, %v2705
    %v2770 = vmul.f32 %v2706, %v2706
    %v2771 = vmul.f32 %v2707, %v2707
    %v2772 = vmul.f32 %v2708, %v2708
    %v2773 = vmul.f32 %v2709, %v2709
    %v2774 = vmul.f32 %v2710, %v2710
    %v2775 = vmul.f32 %v2711, %v2711
    %v2776 = vmul.f32 %v2712, %v2712
    %v2777 = vmul.f32 %v2713, %v2713
    %v2778 = vmul.f32 %v2714, %v2714
    %v2779 = vmul.f32 %v2715, %v2715
    %v2780 = vmul.f32 %v2716, %v2716
    %v2781 = vmul.f32 %v2717, %v2717
    %v2782 = vmul.f32 %v2718, %v2718
    %v2783 = vmul.f32 %v2719, %v2719
    %v2784 = vmul.f32 %v2720, %v2720
    %v2785 = vmul.f32 %v2721, %v2721
    %v2786 = vmul.f32 %v2722, %v2722
    %v2787 = vmul.f32 %v2723, %v2723
    %v2788 = vmul.f32 %v2724, %v2724
    %v2789 = vmul.f32 %v2725, %v2725
    %v2790 = vmul.f32 %v2726, %v2726
    %v2791 = vmul.f32 %v2727, %v2727
    %v2792 = vmul.f32 %v2728, %v2728
    %v2793 = vmul.f32 %v2729, %v2729
    %v2794 = vmul.f32 %v2730, %v2730
    %v2795 = vmul.f32 %v2731, %v2731
    %v2796 = vmul.f32 %v2732, %v2732
    %v2797 = vmul.f32 %v2733, %v2733
    %v2798 = vmul.f32 %v2734, %v2734
    %v2799 = vmul.f32 %v2735, %v2735
    %v2800 = vmul.f32 %v2736, %v2736
    %v2801 = vmul.f32 %v2737, %v2737
    %v2802 = vmul.f32 %v2738, %v2738
    %v2803 = vmul.f32 %v2739, %v2739
    %v2804 = vmul.f32 %v2740, %v2740
    %v2805 = vmul.f32 %v2741, %v2741
    %v2806 = vsel %vm106, %v2742, 0.0
    %v2807 = vsel %vm106, %v2743, 0.0
    %v2808 = vadd.f32 %v2806, %v2807
    %v2809 = vsel %vm106, %v2744, 0.0
    %v2810 = vadd.f32 %v2808, %v2809
    %v2811 = vsel %vm106, %v2745, 0.0
    %v2812 = vadd.f32 %v2810, %v2811
    %v2813 = vsel %vm106, %v2746, 0.0
    %v2814 = vadd.f32 %v2812, %v2813
    %v2815 = vsel %vm106, %v2747, 0.0
    %v2816 = vadd.f32 %v2814, %v2815
    %v2817 = vsel %vm106, %v2748, 0.0
    %v2818 = vadd.f32 %v2816, %v2817
    %v2819 = vsel %vm106, %v2749, 0.0
    %v2820 = vadd.f32 %v2818, %v2819
    %v2821 = vsel %vm106, %v2750, 0.0
    %v2822 = vadd.f32 %v2820, %v2821
    %v2823 = vsel %vm106, %v2751, 0.0
    %v2824 = vadd.f32 %v2822, %v2823
    %v2825 = vsel %vm106, %v2752, 0.0
    %v2826 = vadd.f32 %v2824, %v2825
    %v2827 = vsel %vm106, %v2753, 0.0
    %v2828 = vadd.f32 %v2826, %v2827
    %v2829 = vsel %vm106, %v2754, 0.0
    %v2830 = vadd.f32 %v2828, %v2829
    %v2831 = vsel %vm106, %v2755, 0.0
    %v2832 = vadd.f32 %v2830, %v2831
    %v2833 = vsel %vm106, %v2756, 0.0
    %v2834 = vadd.f32 %v2832, %v2833
    %v2835 = vsel %vm106, %v2757, 0.0
    %v2836 = vadd.f32 %v2834, %v2835
    %v2837 = vsel %vm106, %v2758, 0.0
    %v2838 = vadd.f32 %v2836, %v2837
    %v2839 = vsel %vm106, %v2759, 0.0
    %v2840 = vadd.f32 %v2838, %v2839
    %v2841 = vsel %vm106, %v2760, 0.0
    %v2842 = vadd.f32 %v2840, %v2841
    %v2843 = vsel %vm106, %v2761, 0.0
    %v2844 = vadd.f32 %v2842, %v2843
    %v2845 = vsel %vm106, %v2762, 0.0
    %v2846 = vadd.f32 %v2844, %v2845
    %v2847 = vsel %vm106, %v2763, 0.0
    %v2848 = vadd.f32 %v2846, %v2847
    %v2849 = vsel %vm106, %v2764, 0.0
    %v2850 = vadd.f32 %v2848, %v2849
    %v2851 = vsel %vm106, %v2765, 0.0
    %v2852 = vadd.f32 %v2850, %v2851
    %v2853 = vsel %vm106, %v2766, 0.0
    %v2854 = vadd.f32 %v2852, %v2853
    %v2855 = vsel %vm106, %v2767, 0.0
    %v2856 = vadd.f32 %v2854, %v2855
    %v2857 = vsel %vm106, %v2768, 0.0
    %v2858 = vadd.f32 %v2856, %v2857
    %v2859 = vsel %vm106, %v2769, 0.0
    %v2860 = vadd.f32 %v2858, %v2859
    %v2861 = vsel %vm106, %v2770, 0.0
    %v2862 = vadd.f32 %v2860, %v2861
    %v2863 = vsel %vm106, %v2771, 0.0
    %v2864 = vadd.f32 %v2862, %v2863
    %v2865 = vsel %vm106, %v2772, 0.0
    %v2866 = vadd.f32 %v2864, %v2865
    %v2867 = vsel %vm106, %v2773, 0.0
    %v2868 = vadd.f32 %v2866, %v2867
    %v2869 = vsel %vm106, %v2774, 0.0
    %v2870 = vadd.f32 %v2868, %v2869
    %v2871 = vsel %vm106, %v2775, 0.0
    %v2872 = vadd.f32 %v2870, %v2871
    %v2873 = vsel %vm106, %v2776, 0.0
    %v2874 = vadd.f32 %v2872, %v2873
    %v2875 = vsel %vm106, %v2777, 0.0
    %v2876 = vadd.f32 %v2874, %v2875
    %v2877 = vsel %vm106, %v2778, 0.0
    %v2878 = vadd.f32 %v2876, %v2877
    %v2879 = vsel %vm106, %v2779, 0.0
    %v2880 = vadd.f32 %v2878, %v2879
    %v2881 = vsel %vm106, %v2780, 0.0
    %v2882 = vadd.f32 %v2880, %v2881
    %v2883 = vsel %vm106, %v2781, 0.0
    %v2884 = vadd.f32 %v2882, %v2883
    %v2885 = vsel %vm106, %v2782, 0.0
    %v2886 = vadd.f32 %v2884, %v2885
    %v2887 = vsel %vm106, %v2783, 0.0
    %v2888 = vadd.f32 %v2886, %v2887
    %v2889 = vsel %vm106, %v2784, 0.0
    %v2890 = vadd.f32 %v2888, %v2889
    %v2891 = vsel %vm106, %v2785, 0.0
    %v2892 = vadd.f32 %v2890, %v2891
    %v2893 = vsel %vm106, %v2786, 0.0
    %v2894 = vadd.f32 %v2892, %v2893
    %v2895 = vsel %vm106, %v2787, 0.0
    %v2896 = vadd.f32 %v2894, %v2895
    %v2897 = vsel %vm106, %v2788, 0.0
    %v2898 = vadd.f32 %v2896, %v2897
    %v2899 = vsel %vm106, %v2789, 0.0
    %v2900 = vadd.f32 %v2898, %v2899
    %v2901 = vsel %vm106, %v2790, 0.0
    %v2902 = vadd.f32 %v2900, %v2901
    %v2903 = vsel %vm106, %v2791, 0.0
    %v2904 = vadd.f32 %v2902, %v2903
    %v2905 = vsel %vm106, %v2792, 0.0
    %v2906 = vadd.f32 %v2904, %v2905
    %v2907 = vsel %vm106, %v2793, 0.0
    %v2908 = vadd.f32 %v2906, %v2907
    %v2909 = vsel %vm106, %v2794, 0.0
    %v2910 = vadd.f32 %v2908, %v2909
    %v2911 = vsel %vm106, %v2795, 0.0
    %v2912 = vadd.f32 %v2910, %v2911
    %v2913 = vsel %vm106, %v2796, 0.0
    %v2914 = vadd.f32 %v2912, %v2913
    %v2915 = vsel %vm106, %v2797, 0.0
    %v2916 = vadd.f32 %v2914, %v2915
    %v2917 = vsel %vm106, %v2798, 0.0
    %v2918 = vadd.f32 %v2916, %v2917
    %v2919 = vsel %vm106, %v2799, 0.0
    %v2920 = vadd.f32 %v2918, %v2919
    %v2921 = vsel %vm106, %v2800, 0.0
    %v2922 = vadd.f32 %v2920, %v2921
    %v2923 = vsel %vm106, %v2801, 0.0
    %v2924 = vadd.f32 %v2922, %v2923
    %v2925 = vsel %vm106, %v2802, 0.0
    %v2926 = vadd.f32 %v2924, %v2925
    %v2927 = vsel %vm106, %v2803, 0.0
    %v2928 = vadd.f32 %v2926, %v2927
    %v2929 = vsel %vm106, %v2804, 0.0
    %v2930 = vadd.f32 %v2928, %v2929
    %v2931 = vsel %vm106, %v2805, 0.0
    %v2932 = vadd.f32 %v2930, %v2931
    %2933 = vadd.xlane.f32.xlu0 %v2932
    %v2934 = vpop.xlane.xlu0 %2933
    %v2935 = vrot.slane %v2934, 4
    %v2936 = vadd.f32 %v2934, %v2935
    %v2937 = vrot.slane %v2936, 2
    %v2938 = vadd.f32 %v2936, %v2937
    %v2939 = vrot.slane %v2938, 1
    %v2940 = vadd.f32 %v2938, %v2939
    %s2941 = vtos %v2940
    %v2942 = vstv %s2941
    %2943 = vst [vmem:[#allocation2] sm:$0xff] %v2942
    // Predicated region
    $region18: #{tpu_custom_call.1} parent=1 // pred_check
      _
    $region19: #{tpu_custom_call.1} parent=1 // pred_check_branch
      %2945 = sbr.rel (0) target = $region21
    $region20: #{tpu_custom_call.1} parent=1 // pred_region
      _
    $region21: #{tpu_custom_call.1} parent=1 // pred_fallthru
      _
    // Predicated region
    $region22: #{tpu_custom_call.1} parent=1 // pred_check
      _
    $region23: #{tpu_custom_call.1} parent=1 // pred_check_branch
      %2947 = sbr.rel (0) target = $region25
    $region24: #{tpu_custom_call.1} parent=1 // pred_region
      _
    $region25: #{tpu_custom_call.1} parent=1 // pred_fallthru
      _
    // Predicated region
    $region26: #{tpu_custom_call.1} parent=1 // pred_check
      _
    $region27: #{tpu_custom_call.1} parent=1 // pred_check_branch
      %2949 = sbr.rel (0) target = $region29
    $region28: #{tpu_custom_call.1} parent=1 // pred_region
      %s2951 = ssub.s32 128, 128
      %2952 = vsyncadd [#allocation3], %s2951
      %s2954 = sshll.u32 [#allocation2], 4
      %s2955 = int_to_ptr.vmem [resolvable:$true] %s2954
      %2957 = dma.vmem_to_hbm [thread:$0]  %s2955, 128, %s6, [#allocation3]
    $region29: #{tpu_custom_call.1} parent=1 // pred_fallthru
      _
    // Predicated region
    $region30: #{tpu_custom_call.1} parent=1 // pred_check
      _
    $region31: #{tpu_custom_call.1} parent=1 // pred_check_branch
      %2959 = sbr.rel (0) target = $region33
    $region32: #{tpu_custom_call.1} parent=1 // pred_region
      _
    $region33: #{tpu_custom_call.1} parent=1 // pred_fallthru
      _
    // Predicated region
    $region34: #{tpu_custom_call.1} parent=1 // pred_check
      _
    $region35: #{tpu_custom_call.1} parent=1 // pred_check_branch
      %2961 = sbr.rel (0) target = $region37
    $region36: #{tpu_custom_call.1} parent=1 // pred_region
      _
    $region37: #{tpu_custom_call.1} parent=1 // pred_fallthru
      _
    // Predicated region
    $region38: #{tpu_custom_call.1} parent=1 // pred_check
      _
    $region39: #{tpu_custom_call.1} parent=1 // pred_check_branch
      %2963 = sbr.rel (0) target = $region41
    $region40: #{tpu_custom_call.1} parent=1 // pred_region
      %2964 = dma.done [#allocation3], 128
    $region41: #{tpu_custom_call.1} parent=1 // pred_fallthru
      _
    %2965 = vsyncpa [#allocation3], 1

</llo_original>
